<compile_context>
chip_gen: v7x
topology: tpu7x:2x2x1
jax: 0.10.0
libtpu: 0.0.40
codegen_flags: <defaults>
</compile_context>

<pallas_src>
import functools

import jax
import jax.numpy as jnp
from jax.experimental import pallas as pl
from jax.experimental.pallas import tpu as pltpu  # noqa: F401  (TPU backend)

# ---------------- config (small synthetic BERT) ----------------
VOCAB = 100
VOCAB_PAD = 128          # lane-aligned one-hot / gather-matmul width
MAX_POS = 32
TYPE_VOCAB = 2
HIDDEN = 32
NHEADS = 2
DH = HIDDEN // NHEADS
NLAYERS = 2
INTER = 64
NCLASSES = 5
LN_EPS = 1e-12
LOGIT_PAD = 128          # lane-dense padded logits width
MATMUL_DTYPE = jnp.bfloat16   # MXU-input dtype; accumulation stays f32

# ---------------- small-parameter slab layout ----------------
# One parameter vector per 128-lane row (zero padded), f32.
ROW_EMB_LN_G = 0
ROW_EMB_LN_B = 1
ROW_POOL_B = 2
ROW_CLS_B = 3
ROW_TYPE0 = 4
ROW_TYPE1 = 5
LAYER_ROW_BASE = 8
ROWS_PER_LAYER = 8
(OFF_BQKV, OFF_BO, OFF_LN1G, OFF_LN1B,
 OFF_BI, OFF_BF, OFF_LN2G, OFF_LN2B) = range(8)
SMALL_ROWS = LAYER_ROW_BASE + ROWS_PER_LAYER * NLAYERS   # 24


# ---------------- in-kernel helpers (pure value math, f32) ----------------
def _ln(x, g, b):
    """LayerNorm over last dim.  x:(N,H), g/b:(1,H)."""
    mean = jnp.mean(x, axis=-1, keepdims=True)
    var = jnp.mean((x - mean) ** 2, axis=-1, keepdims=True)
    return (x - mean) * jax.lax.rsqrt(var + LN_EPS) * g + b


def _gelu_tanh(y):
    # TODO(synk): HuggingFace BERT uses erf-GELU; tanh approximation used here.
    return 0.5 * y * (1.0 + jnp.tanh(0.7978845608028654 * (y + 0.044715 * y * y * y)))


def _split_heads(m, B, S):
    """(B*S, HIDDEN) -> (B*NHEADS, S, DH), flat index = b*NHEADS + h."""
    parts = [m[:, h * DH:(h + 1) * DH].reshape(B, 1, S, DH) for h in range(NHEADS)]
    return jnp.concatenate(parts, axis=1).reshape(B * NHEADS, S, DH)


# ---------------- fused whole-model kernel ----------------
def _bert_kernel(idt_ref, amask_ref, wemb_ref, pemb_ref,
                 wqkv_ref, wo_ref, wi_ref, wf_ref, whead_ref, small_ref,
                 out_ref, *, B, S, B_pad):
    BS = B * S
    small = small_ref[...]                                        # (24, 128) f32

    emb_ln_g = small[ROW_EMB_LN_G:ROW_EMB_LN_G + 1, :HIDDEN]
    emb_ln_b = small[ROW_EMB_LN_B:ROW_EMB_LN_B + 1, :HIDDEN]
    pool_b = small[ROW_POOL_B:ROW_POOL_B + 1, :HIDDEN]
    cls_b = small[ROW_CLS_B:ROW_CLS_B + 1, :LOGIT_PAD]
    type0 = small[ROW_TYPE0:ROW_TYPE0 + 1, :HIDDEN]
    type1 = small[ROW_TYPE1:ROW_TYPE1 + 1, :HIDDEN]

    # ---- embeddings: one-hot gather-matmul on the 128-row padded table ----
    idt = idt_ref[...]                                            # (BS, 2) int32
    ids = idt[:, 0:1]
    tids_f = idt[:, 1:2].astype(jnp.float32)
    vocab_iota = jax.lax.broadcasted_iota(jnp.int32, (BS, VOCAB_PAD), 1)
    onehot = (ids == vocab_iota).astype(MATMUL_DTYPE)             # (BS, 128)
    word = jnp.dot(onehot, wemb_ref[...],
                   preferred_element_type=jnp.float32)            # (BS, H)

    typ = type0 * (1.0 - tids_f) + type1 * tids_f                 # (BS, H)
    x = _ln(word + pemb_ref[...] + typ, emb_ln_g, emb_ln_b)
    # TODO(synk): embedding / hidden dropout are identity in eval mode.

    # additive attention mask, replicated per head: flat index = b*NHEADS + h
    mask_add = (1.0 - amask_ref[...]) * -10000.0                  # (B, S)
    mask3 = jnp.broadcast_to(mask_add[:, None, None, :],
                             (B, NHEADS, 1, S)).reshape(B * NHEADS, 1, S)

    scale = 1.0 / (DH ** 0.5)

    # ---- transformer layers (weights stacked along leading layer axis) ----
    for l in range(NLAYERS):
        base = LAYER_ROW_BASE + l * ROWS_PER_LAYER
        bqkv = small[base + OFF_BQKV:base + OFF_BQKV + 1, :3 * HIDDEN]
        bo = small[base + OFF_BO:base + OFF_BO + 1, :HIDDEN]
        ln1g = small[base + OFF_LN1G:base + OFF_LN1G + 1, :HIDDEN]
        ln1b = small[base + OFF_LN1B:base + OFF_LN1B + 1, :HIDDEN]
        bi = small[base + OFF_BI:base + OFF_BI + 1, :INTER]
        bf = small[base + OFF_BF:base + OFF_BF + 1, :HIDDEN]
        ln2g = small[base + OFF_LN2G:base + OFF_LN2G + 1, :HIDDEN]
        ln2b = small[base + OFF_LN2B:base + OFF_LN2B + 1, :HIDDEN]

        # fused QKV projection (bf16 MXU inputs, f32 accumulation)
        qkv = jnp.dot(x.astype(MATMUL_DTYPE), wqkv_ref[l],
                      preferred_element_type=jnp.float32) + bqkv  # (BS, 3H) f32

        q3 = _split_heads(qkv[:, 0:HIDDEN] * scale, B, S).astype(MATMUL_DTYPE)
        k3 = _split_heads(qkv[:, HIDDEN:2 * HIDDEN], B, S).astype(MATMUL_DTYPE)
        v3 = _split_heads(qkv[:, 2 * HIDDEN:3 * HIDDEN], B, S).astype(MATMUL_DTYPE)

        # one batched score matmul over all (batch, head) pairs: (B*NH, S, S)
        s = jax.lax.dot_general(q3, k3, (((2,), (2,)), ((0,), (0,))),
                                preferred_element_type=jnp.float32)
        s = s + mask3
        s = s - jnp.max(s, axis=-1, keepdims=True)
        p = jnp.exp(s)
        p = p * pl.reciprocal(jnp.sum(p, axis=-1, keepdims=True), approx=True)

        # one batched context matmul: (B*NH, S, DH)
        ctx3 = jax.lax.dot_general(p.astype(MATMUL_DTYPE), v3,
                                   (((2,), (1,)), ((0,), (0,))),
                                   preferred_element_type=jnp.float32)

        # merge heads back into contiguous lane slices: (BS, H)
        ctx4 = ctx3.reshape(B, NHEADS, S, DH)
        ctx = jnp.concatenate(
            [ctx4[:, h].reshape(BS, DH) for h in range(NHEADS)], axis=1)

        attn = jnp.dot(ctx.astype(MATMUL_DTYPE), wo_ref[l],
                       preferred_element_type=jnp.float32) + bo
        x = _ln(x + attn, ln1g, ln1b)                             # fused residual+LN

        inter = _gelu_tanh(jnp.dot(x.astype(MATMUL_DTYPE), wi_ref[l],
                                   preferred_element_type=jnp.float32) + bi)
        ffn = jnp.dot(inter.astype(MATMUL_DTYPE), wf_ref[l],
                      preferred_element_type=jnp.float32) + bf
        x = _ln(x + ffn, ln2g, ln2b)                              # fused residual+LN

    # ---- pooler: tanh(W @ hidden[:, 0]) on the [CLS] rows ----
    cls = x.reshape(B, S, HIDDEN)[:, 0:1, :].reshape(B, HIDDEN)   # (B, H)
    if B_pad > B:   # pad rows to a full 8-sublane tile -> unmasked final store
        cls = jnp.concatenate(
            [cls, jnp.zeros((B_pad - B, HIDDEN), jnp.float32)], axis=0)

    whead = whead_ref[...]                                        # (H, 160) bf16
    cls_w = whead[:, 0:LOGIT_PAD]                                 # (H, 128)
    pool_w = whead[:, LOGIT_PAD:LOGIT_PAD + HIDDEN]               # (H, 32)

    pooled = jnp.tanh(jnp.dot(cls.astype(MATMUL_DTYPE), pool_w,
                              preferred_element_type=jnp.float32) + pool_b)

    # nn.Dropout(0.3): identity in eval mode.
    # TODO(synk): training-mode stochastic dropout not applied (inference semantics).

    # ---- classifier linear (lane-dense padded (B_pad, 128) output tile) ----
    logits = jnp.dot(pooled.astype(MATMUL_DTYPE), cls_w,
                     preferred_element_type=jnp.float32) + cls_b
    out_ref[...] = logits.astype(out_ref.dtype)


# ---------------- deterministic parameter init + packing ----------------
def init_params(seed=0):
    key = jax.random.PRNGKey(seed)

    def nrm(k, shape):
        return jax.random.normal(k, shape, jnp.float32) * 0.02

    keys = iter(jax.random.split(key, 5 + NLAYERS * 6))

    word_emb = nrm(next(keys), (VOCAB, HIDDEN))
    pos_emb = nrm(next(keys), (MAX_POS, HIDDEN))
    type_emb = nrm(next(keys), (TYPE_VOCAB, HIDDEN))
    pool_w = nrm(next(keys), (HIDDEN, HIDDEN))
    cls_w = nrm(next(keys), (HIDDEN, NCLASSES))

    wqkv, wo, wi, wf = [], [], [], []
    for _ in range(NLAYERS):
        wq = nrm(next(keys), (HIDDEN, HIDDEN))
        wk = nrm(next(keys), (HIDDEN, HIDDEN))
        wv = nrm(next(keys), (HIDDEN, HIDDEN))
        wqkv.append(jnp.concatenate([wq, wk, wv], axis=1))   # fused QKV weight
        wo.append(nrm(next(keys), (HIDDEN, HIDDEN)))
        wi.append(nrm(next(keys), (HIDDEN, INTER)))
        wf.append(nrm(next(keys), (INTER, HIDDEN)))

    # ---- padded / packed MXU weights (stored bf16) ----
    word_emb_pad = jnp.zeros((VOCAB_PAD, HIDDEN), jnp.float32).at[:VOCAB].set(word_emb)
    cls_w_pad = jnp.zeros((HIDDEN, LOGIT_PAD), jnp.float32).at[:, :NCLASSES].set(cls_w)
    # [classifier (128 lanes) | pooler (32 lanes)] -> both in-kernel slices are
    # vreg-aligned (offsets 0 and 128).
    w_head = jnp.concatenate([cls_w_pad, pool_w], axis=1)          # (H, 160)

    # ---- small-parameter slab (f32): one vector per 128-lane row ----
    def row(v):
        v = jnp.asarray(v, jnp.float32).reshape(-1)
        return jnp.pad(v, (0, 128 - v.shape[0]))

    zeros_h = jnp.zeros((HIDDEN,), jnp.float32)
    ones_h = jnp.ones((HIDDEN,), jnp.float32)
    rows = [row(ones_h),                        # emb LN gamma
            row(zeros_h),                       # emb LN beta
            row(zeros_h),                       # pooler bias
            row(jnp.zeros((LOGIT_PAD,))),       # classifier bias (padded)
            row(type_emb[0]), row(type_emb[1]),
            row(zeros_h), row(zeros_h)]         # pad to LAYER_ROW_BASE
    for _ in range(NLAYERS):
        rows += [row(jnp.zeros((3 * HIDDEN,))),     # bqkv
                 row(zeros_h),                      # bo
                 row(ones_h), row(zeros_h),         # ln1 gamma / beta
                 row(jnp.zeros((INTER,))),          # bi
                 row(zeros_h),                      # bf
                 row(ones_h), row(zeros_h)]         # ln2 gamma / beta
    small = jnp.stack(rows)                         # (SMALL_ROWS, 128) f32
    assert small.shape == (SMALL_ROWS, 128)

    return {
        "word_emb_pad": word_emb_pad.astype(MATMUL_DTYPE),   # (128, H)
        "pos_emb": pos_emb,                                   # (MAX_POS, H) f32
        "wqkv": jnp.stack(wqkv).astype(MATMUL_DTYPE),         # (L, H, 3H)
        "wo": jnp.stack(wo).astype(MATMUL_DTYPE),             # (L, H, H)
        "wi": jnp.stack(wi).astype(MATMUL_DTYPE),             # (L, H, I)
        "wf": jnp.stack(wf).astype(MATMUL_DTYPE),             # (L, I, H)
        "w_head": w_head.astype(MATMUL_DTYPE),                # (H, 160)
        "small": small,                                       # (24, 128) f32
    }


# ---------------- forward pass (single fused pallas_call) ----------------
def bert_movie_plot_classifier(params, input_ids, attention_mask, token_type_ids):
    B, S = input_ids.shape
    B_pad = ((B + 7) // 8) * 8

    # ids + token-type ids merged into one (B*S, 2) int32 operand
    idt = jnp.stack([input_ids.reshape(-1).astype(jnp.int32),
                     token_type_ids.reshape(-1).astype(jnp.int32)], axis=1)
    amask = attention_mask.astype(jnp.float32)                   # (B, S)
    pos = jnp.tile(params["pos_emb"][:S], (B, 1))                # (B*S, H) pre-tiled

    kernel = functools.partial(_bert_kernel, B=B, S=S, B_pad=B_pad)
    out_padded = pl.pallas_call(
        kernel,
        out_shape=jax.ShapeDtypeStruct((B_pad, LOGIT_PAD), jnp.float32),
        # No grid / BlockSpecs: single invocation, 10 packed operands, fully
        # VMEM-resident (total footprint ~60 KB << VMEM on v5e/v6e/v7x).
    )(idt, amask, params["word_emb_pad"], pos,
      params["wqkv"], params["wo"], params["wi"], params["wf"],
      params["w_head"], params["small"])

    return out_padded[:B, :NCLASSES]


if __name__ == "__main__":
    B, S = 2, 8
    key = jax.random.PRNGKey(0)
    k_ids, k_type = jax.random.split(key)

    input_ids = jax.random.randint(k_ids, (B, S), 0, VOCAB, dtype=jnp.int32)
    attention_mask = jnp.array([[1] * S, [1] * (S - 2) + [0, 0]], dtype=jnp.int32)
    token_type_ids = jax.random.randint(k_type, (B, S), 0, TYPE_VOCAB, dtype=jnp.int32)

    params = init_params(seed=0)
    fwd = jax.jit(bert_movie_plot_classifier)
    logits = jax.block_until_ready(
        fwd(params, input_ids, attention_mask, token_type_ids))
    assert logits.shape == (B, NCLASSES) and logits.dtype == jnp.float32
    assert bool(jnp.all(jnp.isfinite(logits)))
    print("KERNEL_OK")
</pallas_src>

<mosaic_0001>
module attributes {stable_mosaic.version = 11 : i64} {
  func.func @_bert_kernel(%arg0: memref<16x2xi32, #tpu.memory_space<vmem>>, %arg1: memref<2x8xf32, #tpu.memory_space<vmem>>, %arg2: memref<128x32xbf16, #tpu.memory_space<vmem>>, %arg3: memref<16x32xf32, #tpu.memory_space<vmem>>, %arg4: memref<2x32x96xbf16, #tpu.memory_space<vmem>>, %arg5: memref<2x32x32xbf16, #tpu.memory_space<vmem>>, %arg6: memref<2x32x64xbf16, #tpu.memory_space<vmem>>, %arg7: memref<2x64x32xbf16, #tpu.memory_space<vmem>>, %arg8: memref<32x160xbf16, #tpu.memory_space<vmem>>, %arg9: memref<24x128xf32, #tpu.memory_space<vmem>>, %arg10: memref<8x128xf32, #tpu.memory_space<vmem>>) attributes {dimension_semantics = [], scalar_prefetch = 0 : i64, scratch_operands = 0 : i64, tpu.core_type = #tpu.core_type<tc>} {
    %c0 = arith.constant 0 : index
    %c0_0 = arith.constant 0 : index
    %0 = vector.load %arg9[%c0, %c0_0] : memref<24x128xf32, #tpu.memory_space<vmem>>, vector<24x128xf32>
    %1 = vector.extract_strided_slice %0 {offsets = [0, 0], sizes = [1, 32], strides = [1, 1]} : vector<24x128xf32> to vector<1x32xf32>
    %2 = vector.extract_strided_slice %0 {offsets = [1, 0], sizes = [1, 32], strides = [1, 1]} : vector<24x128xf32> to vector<1x32xf32>
    %3 = vector.extract_strided_slice %0 {offsets = [2, 0], sizes = [1, 32], strides = [1, 1]} : vector<24x128xf32> to vector<1x32xf32>
    %4 = vector.extract_strided_slice %0 {offsets = [3, 0], sizes = [1, 128], strides = [1, 1]} : vector<24x128xf32> to vector<1x128xf32>
    %5 = vector.extract_strided_slice %0 {offsets = [4, 0], sizes = [1, 32], strides = [1, 1]} : vector<24x128xf32> to vector<1x32xf32>
    %6 = vector.extract_strided_slice %0 {offsets = [5, 0], sizes = [1, 32], strides = [1, 1]} : vector<24x128xf32> to vector<1x32xf32>
    %c0_1 = arith.constant 0 : index
    %c0_2 = arith.constant 0 : index
    %7 = vector.load %arg0[%c0_1, %c0_2] : memref<16x2xi32, #tpu.memory_space<vmem>>, vector<16x2xi32>
    %8 = vector.extract_strided_slice %7 {offsets = [0, 0], sizes = [16, 1], strides = [1, 1]} : vector<16x2xi32> to vector<16x1xi32>
    %9 = vector.extract_strided_slice %7 {offsets = [0, 1], sizes = [16, 1], strides = [1, 1]} : vector<16x2xi32> to vector<16x1xi32>
    %10 = arith.sitofp %9 : vector<16x1xi32> to vector<16x1xf32>
    %11 = tpu.iota {dimensions = array<i32: 1>} : vector<16x128xi32>
    %12 = vector.broadcast %8 : vector<16x1xi32> to vector<16x128xi32>
    %13 = arith.cmpi eq, %12, %11 : vector<16x128xi32>
    %14 = arith.extui %13 : vector<16x128xi1> to vector<16x128xi32>
    %15 = arith.sitofp %14 : vector<16x128xi32> to vector<16x128xf32>
    %16 = arith.truncf %15 : vector<16x128xf32> to vector<16x128xbf16>
    %c0_3 = arith.constant 0 : index
    %c0_4 = arith.constant 0 : index
    %17 = vector.load %arg2[%c0_3, %c0_4] : memref<128x32xbf16, #tpu.memory_space<vmem>>, vector<128x32xbf16>
    %cst = arith.constant dense<0.000000e+00> : vector<16x32xf32>
    %18 = tpu.matmul %16, %17, %cst {dimension_numbers = #tpu.dot_dimension_numbers<[1], [0], [0], [1], [0, 0, 1, 1], [], []>} : vector<16x128xbf16>, vector<128x32xbf16>, vector<16x32xf32> -> vector<16x32xf32>
    %cst_5 = arith.constant 1.000000e+00 : f32
    %19 = vector.broadcast %cst_5 : f32 to vector<16x1xf32>
    %20 = arith.subf %19, %10 : vector<16x1xf32>
    %21 = vector.broadcast %5 : vector<1x32xf32> to vector<16x32xf32>
    %22 = vector.broadcast %20 : vector<16x1xf32> to vector<16x32xf32>
    %23 = arith.mulf %21, %22 : vector<16x32xf32>
    %24 = vector.broadcast %6 : vector<1x32xf32> to vector<16x32xf32>
    %25 = vector.broadcast %10 : vector<16x1xf32> to vector<16x32xf32>
    %26 = arith.mulf %24, %25 : vector<16x32xf32>
    %27 = arith.addf %23, %26 : vector<16x32xf32>
    %c0_6 = arith.constant 0 : index
    %c0_7 = arith.constant 0 : index
    %28 = vector.load %arg3[%c0_6, %c0_7] : memref<16x32xf32, #tpu.memory_space<vmem>>, vector<16x32xf32>
    %29 = arith.addf %18, %28 : vector<16x32xf32>
    %30 = arith.addf %29, %27 : vector<16x32xf32>
    %cst_8 = arith.constant dense<0.000000e+00> : vector<16xf32>
    %31 = vector.multi_reduction <add>, %30, %cst_8 [1] : vector<16x32xf32> to vector<16xf32>
    %32 = vector.shape_cast %31 : vector<16xf32> to vector<16x1xf32>
    %cst_9 = arith.constant 3.200000e+01 : f32
    %33 = vector.broadcast %cst_9 : f32 to vector<16x1xf32>
    %34 = arith.divf %32, %33 : vector<16x1xf32>
    %35 = vector.broadcast %34 : vector<16x1xf32> to vector<16x32xf32>
    %36 = arith.subf %30, %35 : vector<16x32xf32>
    %37 = arith.mulf %36, %36 : vector<16x32xf32>
    %cst_10 = arith.constant dense<0.000000e+00> : vector<16xf32>
    %38 = vector.multi_reduction <add>, %37, %cst_10 [1] : vector<16x32xf32> to vector<16xf32>
    %39 = vector.shape_cast %38 : vector<16xf32> to vector<16x1xf32>
    %cst_11 = arith.constant 3.200000e+01 : f32
    %40 = vector.broadcast %cst_11 : f32 to vector<16x1xf32>
    %41 = arith.divf %39, %40 : vector<16x1xf32>
    %42 = vector.broadcast %34 : vector<16x1xf32> to vector<16x32xf32>
    %43 = arith.subf %30, %42 : vector<16x32xf32>
    %cst_12 = arith.constant 9.99999996E-13 : f32
    %44 = vector.broadcast %cst_12 : f32 to vector<16x1xf32>
    %45 = arith.addf %41, %44 : vector<16x1xf32>
    %46 = math.rsqrt %45 : vector<16x1xf32>
    %47 = vector.broadcast %46 : vector<16x1xf32> to vector<16x32xf32>
    %48 = arith.mulf %43, %47 : vector<16x32xf32>
    %49 = vector.broadcast %1 : vector<1x32xf32> to vector<16x32xf32>
    %50 = arith.mulf %48, %49 : vector<16x32xf32>
    %51 = vector.broadcast %2 : vector<1x32xf32> to vector<16x32xf32>
    %52 = arith.addf %50, %51 : vector<16x32xf32>
    %c0_13 = arith.constant 0 : index
    %c0_14 = arith.constant 0 : index
    %53 = vector.load %arg1[%c0_13, %c0_14] : memref<2x8xf32, #tpu.memory_space<vmem>>, vector<2x8xf32>
    %cst_15 = arith.constant 1.000000e+00 : f32
    %54 = vector.broadcast %cst_15 : f32 to vector<2x8xf32>
    %55 = arith.subf %54, %53 : vector<2x8xf32>
    %cst_16 = arith.constant -1.000000e+04 : f32
    %56 = vector.broadcast %cst_16 : f32 to vector<2x8xf32>
    %57 = arith.mulf %55, %56 : vector<2x8xf32>
    %58 = vector.shape_cast %57 : vector<2x8xf32> to vector<2x1x1x8xf32>
    %59 = vector.shape_cast %58 : vector<2x1x1x8xf32> to vector<2x1x1x8xf32>
    %60 = vector.broadcast %59 : vector<2x1x1x8xf32> to vector<2x2x1x8xf32>
    %61 = vector.shape_cast %60 : vector<2x2x1x8xf32> to vector<4x1x8xf32>
    %62 = vector.extract_strided_slice %0 {offsets = [8, 0], sizes = [1, 96], strides = [1, 1]} : vector<24x128xf32> to vector<1x96xf32>
    %63 = vector.extract_strided_slice %0 {offsets = [9, 0], sizes = [1, 32], strides = [1, 1]} : vector<24x128xf32> to vector<1x32xf32>
    %64 = vector.extract_strided_slice %0 {offsets = [10, 0], sizes = [1, 32], strides = [1, 1]} : vector<24x128xf32> to vector<1x32xf32>
    %65 = vector.extract_strided_slice %0 {offsets = [11, 0], sizes = [1, 32], strides = [1, 1]} : vector<24x128xf32> to vector<1x32xf32>
    %66 = vector.extract_strided_slice %0 {offsets = [12, 0], sizes = [1, 64], strides = [1, 1]} : vector<24x128xf32> to vector<1x64xf32>
    %67 = vector.extract_strided_slice %0 {offsets = [13, 0], sizes = [1, 32], strides = [1, 1]} : vector<24x128xf32> to vector<1x32xf32>
    %68 = vector.extract_strided_slice %0 {offsets = [14, 0], sizes = [1, 32], strides = [1, 1]} : vector<24x128xf32> to vector<1x32xf32>
    %69 = vector.extract_strided_slice %0 {offsets = [15, 0], sizes = [1, 32], strides = [1, 1]} : vector<24x128xf32> to vector<1x32xf32>
    %70 = arith.truncf %52 : vector<16x32xf32> to vector<16x32xbf16>
    %c0_17 = arith.constant 0 : index
    %c0_18 = arith.constant 0 : index
    %c0_19 = arith.constant 0 : index
    %71 = vector.load %arg4[%c0_17, %c0_18, %c0_19] : memref<2x32x96xbf16, #tpu.memory_space<vmem>>, vector<1x32x96xbf16>
    %72 = vector.shape_cast %71 : vector<1x32x96xbf16> to vector<32x96xbf16>
    %cst_20 = arith.constant dense<0.000000e+00> : vector<16x96xf32>
    %73 = tpu.matmul %70, %72, %cst_20 {dimension_numbers = #tpu.dot_dimension_numbers<[1], [0], [0], [1], [0, 0, 1, 1], [], []>} : vector<16x32xbf16>, vector<32x96xbf16>, vector<16x96xf32> -> vector<16x96xf32>
    %74 = vector.broadcast %62 : vector<1x96xf32> to vector<16x96xf32>
    %75 = arith.addf %73, %74 : vector<16x96xf32>
    %76 = vector.extract_strided_slice %75 {offsets = [0, 0], sizes = [16, 32], strides = [1, 1]} : vector<16x96xf32> to vector<16x32xf32>
    %cst_21 = arith.constant 2.500000e-01 : f32
    %77 = vector.broadcast %cst_21 : f32 to vector<16x32xf32>
    %78 = arith.mulf %76, %77 : vector<16x32xf32>
    %79 = vector.extract_strided_slice %78 {offsets = [0, 0], sizes = [16, 16], strides = [1, 1]} : vector<16x32xf32> to vector<16x16xf32>
    %80 = vector.shape_cast %79 : vector<16x16xf32> to vector<2x1x8x16xf32>
    %81 = vector.extract_strided_slice %78 {offsets = [0, 16], sizes = [16, 16], strides = [1, 1]} : vector<16x32xf32> to vector<16x16xf32>
    %82 = vector.shape_cast %81 : vector<16x16xf32> to vector<2x1x8x16xf32>
    %83 = tpu.concatenate %80, %82 in 1 : vector<2x1x8x16xf32>, vector<2x1x8x16xf32> -> vector<2x2x8x16xf32>
    %84 = vector.shape_cast %83 : vector<2x2x8x16xf32> to vector<4x8x16xf32>
    %85 = arith.truncf %84 : vector<4x8x16xf32> to vector<4x8x16xbf16>
    %86 = vector.extract_strided_slice %75 {offsets = [0, 32], sizes = [16, 32], strides = [1, 1]} : vector<16x96xf32> to vector<16x32xf32>
    %87 = vector.extract_strided_slice %86 {offsets = [0, 0], sizes = [16, 16], strides = [1, 1]} : vector<16x32xf32> to vector<16x16xf32>
    %88 = vector.shape_cast %87 : vector<16x16xf32> to vector<2x1x8x16xf32>
    %89 = vector.extract_strided_slice %86 {offsets = [0, 16], sizes = [16, 16], strides = [1, 1]} : vector<16x32xf32> to vector<16x16xf32>
    %90 = vector.shape_cast %89 : vector<16x16xf32> to vector<2x1x8x16xf32>
    %91 = tpu.concatenate %88, %90 in 1 : vector<2x1x8x16xf32>, vector<2x1x8x16xf32> -> vector<2x2x8x16xf32>
    %92 = vector.shape_cast %91 : vector<2x2x8x16xf32> to vector<4x8x16xf32>
    %93 = arith.truncf %92 : vector<4x8x16xf32> to vector<4x8x16xbf16>
    %94 = vector.extract_strided_slice %75 {offsets = [0, 64], sizes = [16, 32], strides = [1, 1]} : vector<16x96xf32> to vector<16x32xf32>
    %95 = vector.extract_strided_slice %94 {offsets = [0, 0], sizes = [16, 16], strides = [1, 1]} : vector<16x32xf32> to vector<16x16xf32>
    %96 = vector.shape_cast %95 : vector<16x16xf32> to vector<2x1x8x16xf32>
    %97 = vector.extract_strided_slice %94 {offsets = [0, 16], sizes = [16, 16], strides = [1, 1]} : vector<16x32xf32> to vector<16x16xf32>
    %98 = vector.shape_cast %97 : vector<16x16xf32> to vector<2x1x8x16xf32>
    %99 = tpu.concatenate %96, %98 in 1 : vector<2x1x8x16xf32>, vector<2x1x8x16xf32> -> vector<2x2x8x16xf32>
    %100 = vector.shape_cast %99 : vector<2x2x8x16xf32> to vector<4x8x16xf32>
    %101 = arith.truncf %100 : vector<4x8x16xf32> to vector<4x8x16xbf16>
    %cst_22 = arith.constant dense<0.000000e+00> : vector<4x8x8xf32>
    %102 = tpu.matmul %85, %93, %cst_22 {dimension_numbers = #tpu.dot_dimension_numbers<[2], [2], [1], [1], [0, 0, 0, 1, 1, 1], [0], [0]>} : vector<4x8x16xbf16>, vector<4x8x16xbf16>, vector<4x8x8xf32> -> vector<4x8x8xf32>
    %103 = vector.broadcast %61 : vector<4x1x8xf32> to vector<4x8x8xf32>
    %104 = arith.addf %102, %103 : vector<4x8x8xf32>
    %cst_23 = arith.constant dense<0xFF800000> : vector<4x8xf32>
    %105 = vector.multi_reduction <maximumf>, %104, %cst_23 [2] : vector<4x8x8xf32> to vector<4x8xf32>
    %106 = vector.shape_cast %105 : vector<4x8xf32> to vector<4x8x1xf32>
    %107 = vector.broadcast %106 : vector<4x8x1xf32> to vector<4x8x8xf32>
    %108 = arith.subf %104, %107 : vector<4x8x8xf32>
    %109 = math.exp %108 : vector<4x8x8xf32>
    %cst_24 = arith.constant dense<0.000000e+00> : vector<4x8xf32>
    %110 = vector.multi_reduction <add>, %109, %cst_24 [2] : vector<4x8x8xf32> to vector<4x8xf32>
    %111 = vector.shape_cast %110 : vector<4x8xf32> to vector<4x8x1xf32>
    %112 = tpu.reciprocal %111 {approx = true} : vector<4x8x1xf32> -> vector<4x8x1xf32>
    %113 = vector.broadcast %112 : vector<4x8x1xf32> to vector<4x8x8xf32>
    %114 = arith.mulf %109, %113 : vector<4x8x8xf32>
    %115 = arith.truncf %114 : vector<4x8x8xf32> to vector<4x8x8xbf16>
    %cst_25 = arith.constant dense<0.000000e+00> : vector<4x8x16xf32>
    %116 = tpu.matmul %115, %101, %cst_25 {dimension_numbers = #tpu.dot_dimension_numbers<[2], [1], [1], [2], [0, 0, 0, 1, 1, 2], [0], [0]>} : vector<4x8x8xbf16>, vector<4x8x16xbf16>, vector<4x8x16xf32> -> vector<4x8x16xf32>
    %117 = vector.shape_cast %116 : vector<4x8x16xf32> to vector<2x2x8x16xf32>
    %118 = vector.extract_strided_slice %117 {offsets = [0, 0, 0, 0], sizes = [2, 1, 8, 16], strides = [1, 1, 1, 1]} : vector<2x2x8x16xf32> to vector<2x1x8x16xf32>
    %119 = vector.shape_cast %118 : vector<2x1x8x16xf32> to vector<2x8x16xf32>
    %120 = vector.shape_cast %119 : vector<2x8x16xf32> to vector<16x16xf32>
    %121 = vector.extract_strided_slice %117 {offsets = [0, 1, 0, 0], sizes = [2, 1, 8, 16], strides = [1, 1, 1, 1]} : vector<2x2x8x16xf32> to vector<2x1x8x16xf32>
    %122 = vector.shape_cast %121 : vector<2x1x8x16xf32> to vector<2x8x16xf32>
    %123 = vector.shape_cast %122 : vector<2x8x16xf32> to vector<16x16xf32>
    %124 = tpu.concatenate %120, %123 in 1 : vector<16x16xf32>, vector<16x16xf32> -> vector<16x32xf32>
    %125 = arith.truncf %124 : vector<16x32xf32> to vector<16x32xbf16>
    %c0_26 = arith.constant 0 : index
    %c0_27 = arith.constant 0 : index
    %c0_28 = arith.constant 0 : index
    %126 = vector.load %arg5[%c0_26, %c0_27, %c0_28] : memref<2x32x32xbf16, #tpu.memory_space<vmem>>, vector<1x32x32xbf16>
    %127 = vector.shape_cast %126 : vector<1x32x32xbf16> to vector<32x32xbf16>
    %cst_29 = arith.constant dense<0.000000e+00> : vector<16x32xf32>
    %128 = tpu.matmul %125, %127, %cst_29 {dimension_numbers = #tpu.dot_dimension_numbers<[1], [0], [0], [1], [0, 0, 1, 1], [], []>} : vector<16x32xbf16>, vector<32x32xbf16>, vector<16x32xf32> -> vector<16x32xf32>
    %129 = vector.broadcast %63 : vector<1x32xf32> to vector<16x32xf32>
    %130 = arith.addf %128, %129 : vector<16x32xf32>
    %131 = arith.addf %52, %130 : vector<16x32xf32>
    %cst_30 = arith.constant dense<0.000000e+00> : vector<16xf32>
    %132 = vector.multi_reduction <add>, %131, %cst_30 [1] : vector<16x32xf32> to vector<16xf32>
    %133 = vector.shape_cast %132 : vector<16xf32> to vector<16x1xf32>
    %cst_31 = arith.constant 3.200000e+01 : f32
    %134 = vector.broadcast %cst_31 : f32 to vector<16x1xf32>
    %135 = arith.divf %133, %134 : vector<16x1xf32>
    %136 = vector.broadcast %135 : vector<16x1xf32> to vector<16x32xf32>
    %137 = arith.subf %131, %136 : vector<16x32xf32>
    %138 = arith.mulf %137, %137 : vector<16x32xf32>
    %cst_32 = arith.constant dense<0.000000e+00> : vector<16xf32>
    %139 = vector.multi_reduction <add>, %138, %cst_32 [1] : vector<16x32xf32> to vector<16xf32>
    %140 = vector.shape_cast %139 : vector<16xf32> to vector<16x1xf32>
    %cst_33 = arith.constant 3.200000e+01 : f32
    %141 = vector.broadcast %cst_33 : f32 to vector<16x1xf32>
    %142 = arith.divf %140, %141 : vector<16x1xf32>
    %143 = vector.broadcast %135 : vector<16x1xf32> to vector<16x32xf32>
    %144 = arith.subf %131, %143 : vector<16x32xf32>
    %cst_34 = arith.constant 9.99999996E-13 : f32
    %145 = vector.broadcast %cst_34 : f32 to vector<16x1xf32>
    %146 = arith.addf %142, %145 : vector<16x1xf32>
    %147 = math.rsqrt %146 : vector<16x1xf32>
    %148 = vector.broadcast %147 : vector<16x1xf32> to vector<16x32xf32>
    %149 = arith.mulf %144, %148 : vector<16x32xf32>
    %150 = vector.broadcast %64 : vector<1x32xf32> to vector<16x32xf32>
    %151 = arith.mulf %149, %150 : vector<16x32xf32>
    %152 = vector.broadcast %65 : vector<1x32xf32> to vector<16x32xf32>
    %153 = arith.addf %151, %152 : vector<16x32xf32>
    %154 = arith.truncf %153 : vector<16x32xf32> to vector<16x32xbf16>
    %c0_35 = arith.constant 0 : index
    %c0_36 = arith.constant 0 : index
    %c0_37 = arith.constant 0 : index
    %155 = vector.load %arg6[%c0_35, %c0_36, %c0_37] : memref<2x32x64xbf16, #tpu.memory_space<vmem>>, vector<1x32x64xbf16>
    %156 = vector.shape_cast %155 : vector<1x32x64xbf16> to vector<32x64xbf16>
    %cst_38 = arith.constant dense<0.000000e+00> : vector<16x64xf32>
    %157 = tpu.matmul %154, %156, %cst_38 {dimension_numbers = #tpu.dot_dimension_numbers<[1], [0], [0], [1], [0, 0, 1, 1], [], []>} : vector<16x32xbf16>, vector<32x64xbf16>, vector<16x64xf32> -> vector<16x64xf32>
    %158 = vector.broadcast %66 : vector<1x64xf32> to vector<16x64xf32>
    %159 = arith.addf %157, %158 : vector<16x64xf32>
    %cst_39 = arith.constant 5.000000e-01 : f32
    %160 = vector.broadcast %cst_39 : f32 to vector<16x64xf32>
    %161 = arith.mulf %160, %159 : vector<16x64xf32>
    %cst_40 = arith.constant 4.471500e-02 : f32
    %162 = vector.broadcast %cst_40 : f32 to vector<16x64xf32>
    %163 = arith.mulf %162, %159 : vector<16x64xf32>
    %164 = arith.mulf %163, %159 : vector<16x64xf32>
    %165 = arith.mulf %164, %159 : vector<16x64xf32>
    %166 = arith.addf %159, %165 : vector<16x64xf32>
    %cst_41 = arith.constant 0.797884583 : f32
    %167 = vector.broadcast %cst_41 : f32 to vector<16x64xf32>
    %168 = arith.mulf %167, %166 : vector<16x64xf32>
    %169 = math.tanh %168 : vector<16x64xf32>
    %cst_42 = arith.constant 1.000000e+00 : f32
    %170 = vector.broadcast %cst_42 : f32 to vector<16x64xf32>
    %171 = arith.addf %170, %169 : vector<16x64xf32>
    %172 = arith.mulf %161, %171 : vector<16x64xf32>
    %173 = arith.truncf %172 : vector<16x64xf32> to vector<16x64xbf16>
    %c0_43 = arith.constant 0 : index
    %c0_44 = arith.constant 0 : index
    %c0_45 = arith.constant 0 : index
    %174 = vector.load %arg7[%c0_43, %c0_44, %c0_45] : memref<2x64x32xbf16, #tpu.memory_space<vmem>>, vector<1x64x32xbf16>
    %175 = vector.shape_cast %174 : vector<1x64x32xbf16> to vector<64x32xbf16>
    %cst_46 = arith.constant dense<0.000000e+00> : vector<16x32xf32>
    %176 = tpu.matmul %173, %175, %cst_46 {dimension_numbers = #tpu.dot_dimension_numbers<[1], [0], [0], [1], [0, 0, 1, 1], [], []>} : vector<16x64xbf16>, vector<64x32xbf16>, vector<16x32xf32> -> vector<16x32xf32>
    %177 = vector.broadcast %67 : vector<1x32xf32> to vector<16x32xf32>
    %178 = arith.addf %176, %177 : vector<16x32xf32>
    %179 = arith.addf %153, %178 : vector<16x32xf32>
    %cst_47 = arith.constant dense<0.000000e+00> : vector<16xf32>
    %180 = vector.multi_reduction <add>, %179, %cst_47 [1] : vector<16x32xf32> to vector<16xf32>
    %181 = vector.shape_cast %180 : vector<16xf32> to vector<16x1xf32>
    %cst_48 = arith.constant 3.200000e+01 : f32
    %182 = vector.broadcast %cst_48 : f32 to vector<16x1xf32>
    %183 = arith.divf %181, %182 : vector<16x1xf32>
    %184 = vector.broadcast %183 : vector<16x1xf32> to vector<16x32xf32>
    %185 = arith.subf %179, %184 : vector<16x32xf32>
    %186 = arith.mulf %185, %185 : vector<16x32xf32>
    %cst_49 = arith.constant dense<0.000000e+00> : vector<16xf32>
    %187 = vector.multi_reduction <add>, %186, %cst_49 [1] : vector<16x32xf32> to vector<16xf32>
    %188 = vector.shape_cast %187 : vector<16xf32> to vector<16x1xf32>
    %cst_50 = arith.constant 3.200000e+01 : f32
    %189 = vector.broadcast %cst_50 : f32 to vector<16x1xf32>
    %190 = arith.divf %188, %189 : vector<16x1xf32>
    %191 = vector.broadcast %183 : vector<16x1xf32> to vector<16x32xf32>
    %192 = arith.subf %179, %191 : vector<16x32xf32>
    %cst_51 = arith.constant 9.99999996E-13 : f32
    %193 = vector.broadcast %cst_51 : f32 to vector<16x1xf32>
    %194 = arith.addf %190, %193 : vector<16x1xf32>
    %195 = math.rsqrt %194 : vector<16x1xf32>
    %196 = vector.broadcast %195 : vector<16x1xf32> to vector<16x32xf32>
    %197 = arith.mulf %192, %196 : vector<16x32xf32>
    %198 = vector.broadcast %68 : vector<1x32xf32> to vector<16x32xf32>
    %199 = arith.mulf %197, %198 : vector<16x32xf32>
    %200 = vector.broadcast %69 : vector<1x32xf32> to vector<16x32xf32>
    %201 = arith.addf %199, %200 : vector<16x32xf32>
    %202 = vector.extract_strided_slice %0 {offsets = [16, 0], sizes = [1, 96], strides = [1, 1]} : vector<24x128xf32> to vector<1x96xf32>
    %203 = vector.extract_strided_slice %0 {offsets = [17, 0], sizes = [1, 32], strides = [1, 1]} : vector<24x128xf32> to vector<1x32xf32>
    %204 = vector.extract_strided_slice %0 {offsets = [18, 0], sizes = [1, 32], strides = [1, 1]} : vector<24x128xf32> to vector<1x32xf32>
    %205 = vector.extract_strided_slice %0 {offsets = [19, 0], sizes = [1, 32], strides = [1, 1]} : vector<24x128xf32> to vector<1x32xf32>
    %206 = vector.extract_strided_slice %0 {offsets = [20, 0], sizes = [1, 64], strides = [1, 1]} : vector<24x128xf32> to vector<1x64xf32>
    %207 = vector.extract_strided_slice %0 {offsets = [21, 0], sizes = [1, 32], strides = [1, 1]} : vector<24x128xf32> to vector<1x32xf32>
    %208 = vector.extract_strided_slice %0 {offsets = [22, 0], sizes = [1, 32], strides = [1, 1]} : vector<24x128xf32> to vector<1x32xf32>
    %209 = vector.extract_strided_slice %0 {offsets = [23, 0], sizes = [1, 32], strides = [1, 1]} : vector<24x128xf32> to vector<1x32xf32>
    %210 = arith.truncf %201 : vector<16x32xf32> to vector<16x32xbf16>
    %c1 = arith.constant 1 : index
    %c0_52 = arith.constant 0 : index
    %c0_53 = arith.constant 0 : index
    %211 = vector.load %arg4[%c1, %c0_52, %c0_53] : memref<2x32x96xbf16, #tpu.memory_space<vmem>>, vector<1x32x96xbf16>
    %212 = vector.shape_cast %211 : vector<1x32x96xbf16> to vector<32x96xbf16>
    %cst_54 = arith.constant dense<0.000000e+00> : vector<16x96xf32>
    %213 = tpu.matmul %210, %212, %cst_54 {dimension_numbers = #tpu.dot_dimension_numbers<[1], [0], [0], [1], [0, 0, 1, 1], [], []>} : vector<16x32xbf16>, vector<32x96xbf16>, vector<16x96xf32> -> vector<16x96xf32>
    %214 = vector.broadcast %202 : vector<1x96xf32> to vector<16x96xf32>
    %215 = arith.addf %213, %214 : vector<16x96xf32>
    %216 = vector.extract_strided_slice %215 {offsets = [0, 0], sizes = [16, 32], strides = [1, 1]} : vector<16x96xf32> to vector<16x32xf32>
    %cst_55 = arith.constant 2.500000e-01 : f32
    %217 = vector.broadcast %cst_55 : f32 to vector<16x32xf32>
    %218 = arith.mulf %216, %217 : vector<16x32xf32>
    %219 = vector.extract_strided_slice %218 {offsets = [0, 0], sizes = [16, 16], strides = [1, 1]} : vector<16x32xf32> to vector<16x16xf32>
    %220 = vector.shape_cast %219 : vector<16x16xf32> to vector<2x1x8x16xf32>
    %221 = vector.extract_strided_slice %218 {offsets = [0, 16], sizes = [16, 16], strides = [1, 1]} : vector<16x32xf32> to vector<16x16xf32>
    %222 = vector.shape_cast %221 : vector<16x16xf32> to vector<2x1x8x16xf32>
    %223 = tpu.concatenate %220, %222 in 1 : vector<2x1x8x16xf32>, vector<2x1x8x16xf32> -> vector<2x2x8x16xf32>
    %224 = vector.shape_cast %223 : vector<2x2x8x16xf32> to vector<4x8x16xf32>
    %225 = arith.truncf %224 : vector<4x8x16xf32> to vector<4x8x16xbf16>
    %226 = vector.extract_strided_slice %215 {offsets = [0, 32], sizes = [16, 32], strides = [1, 1]} : vector<16x96xf32> to vector<16x32xf32>
    %227 = vector.extract_strided_slice %226 {offsets = [0, 0], sizes = [16, 16], strides = [1, 1]} : vector<16x32xf32> to vector<16x16xf32>
    %228 = vector.shape_cast %227 : vector<16x16xf32> to vector<2x1x8x16xf32>
    %229 = vector.extract_strided_slice %226 {offsets = [0, 16], sizes = [16, 16], strides = [1, 1]} : vector<16x32xf32> to vector<16x16xf32>
    %230 = vector.shape_cast %229 : vector<16x16xf32> to vector<2x1x8x16xf32>
    %231 = tpu.concatenate %228, %230 in 1 : vector<2x1x8x16xf32>, vector<2x1x8x16xf32> -> vector<2x2x8x16xf32>
    %232 = vector.shape_cast %231 : vector<2x2x8x16xf32> to vector<4x8x16xf32>
    %233 = arith.truncf %232 : vector<4x8x16xf32> to vector<4x8x16xbf16>
    %234 = vector.extract_strided_slice %215 {offsets = [0, 64], sizes = [16, 32], strides = [1, 1]} : vector<16x96xf32> to vector<16x32xf32>
    %235 = vector.extract_strided_slice %234 {offsets = [0, 0], sizes = [16, 16], strides = [1, 1]} : vector<16x32xf32> to vector<16x16xf32>
    %236 = vector.shape_cast %235 : vector<16x16xf32> to vector<2x1x8x16xf32>
    %237 = vector.extract_strided_slice %234 {offsets = [0, 16], sizes = [16, 16], strides = [1, 1]} : vector<16x32xf32> to vector<16x16xf32>
    %238 = vector.shape_cast %237 : vector<16x16xf32> to vector<2x1x8x16xf32>
    %239 = tpu.concatenate %236, %238 in 1 : vector<2x1x8x16xf32>, vector<2x1x8x16xf32> -> vector<2x2x8x16xf32>
    %240 = vector.shape_cast %239 : vector<2x2x8x16xf32> to vector<4x8x16xf32>
    %241 = arith.truncf %240 : vector<4x8x16xf32> to vector<4x8x16xbf16>
    %cst_56 = arith.constant dense<0.000000e+00> : vector<4x8x8xf32>
    %242 = tpu.matmul %225, %233, %cst_56 {dimension_numbers = #tpu.dot_dimension_numbers<[2], [2], [1], [1], [0, 0, 0, 1, 1, 1], [0], [0]>} : vector<4x8x16xbf16>, vector<4x8x16xbf16>, vector<4x8x8xf32> -> vector<4x8x8xf32>
    %243 = vector.broadcast %61 : vector<4x1x8xf32> to vector<4x8x8xf32>
    %244 = arith.addf %242, %243 : vector<4x8x8xf32>
    %cst_57 = arith.constant dense<0xFF800000> : vector<4x8xf32>
    %245 = vector.multi_reduction <maximumf>, %244, %cst_57 [2] : vector<4x8x8xf32> to vector<4x8xf32>
    %246 = vector.shape_cast %245 : vector<4x8xf32> to vector<4x8x1xf32>
    %247 = vector.broadcast %246 : vector<4x8x1xf32> to vector<4x8x8xf32>
    %248 = arith.subf %244, %247 : vector<4x8x8xf32>
    %249 = math.exp %248 : vector<4x8x8xf32>
    %cst_58 = arith.constant dense<0.000000e+00> : vector<4x8xf32>
    %250 = vector.multi_reduction <add>, %249, %cst_58 [2] : vector<4x8x8xf32> to vector<4x8xf32>
    %251 = vector.shape_cast %250 : vector<4x8xf32> to vector<4x8x1xf32>
    %252 = tpu.reciprocal %251 {approx = true} : vector<4x8x1xf32> -> vector<4x8x1xf32>
    %253 = vector.broadcast %252 : vector<4x8x1xf32> to vector<4x8x8xf32>
    %254 = arith.mulf %249, %253 : vector<4x8x8xf32>
    %255 = arith.truncf %254 : vector<4x8x8xf32> to vector<4x8x8xbf16>
    %cst_59 = arith.constant dense<0.000000e+00> : vector<4x8x16xf32>
    %256 = tpu.matmul %255, %241, %cst_59 {dimension_numbers = #tpu.dot_dimension_numbers<[2], [1], [1], [2], [0, 0, 0, 1, 1, 2], [0], [0]>} : vector<4x8x8xbf16>, vector<4x8x16xbf16>, vector<4x8x16xf32> -> vector<4x8x16xf32>
    %257 = vector.shape_cast %256 : vector<4x8x16xf32> to vector<2x2x8x16xf32>
    %258 = vector.extract_strided_slice %257 {offsets = [0, 0, 0, 0], sizes = [2, 1, 8, 16], strides = [1, 1, 1, 1]} : vector<2x2x8x16xf32> to vector<2x1x8x16xf32>
    %259 = vector.shape_cast %258 : vector<2x1x8x16xf32> to vector<2x8x16xf32>
    %260 = vector.shape_cast %259 : vector<2x8x16xf32> to vector<16x16xf32>
    %261 = vector.extract_strided_slice %257 {offsets = [0, 1, 0, 0], sizes = [2, 1, 8, 16], strides = [1, 1, 1, 1]} : vector<2x2x8x16xf32> to vector<2x1x8x16xf32>
    %262 = vector.shape_cast %261 : vector<2x1x8x16xf32> to vector<2x8x16xf32>
    %263 = vector.shape_cast %262 : vector<2x8x16xf32> to vector<16x16xf32>
    %264 = tpu.concatenate %260, %263 in 1 : vector<16x16xf32>, vector<16x16xf32> -> vector<16x32xf32>
    %265 = arith.truncf %264 : vector<16x32xf32> to vector<16x32xbf16>
    %c1_60 = arith.constant 1 : index
    %c0_61 = arith.constant 0 : index
    %c0_62 = arith.constant 0 : index
    %266 = vector.load %arg5[%c1_60, %c0_61, %c0_62] : memref<2x32x32xbf16, #tpu.memory_space<vmem>>, vector<1x32x32xbf16>
    %267 = vector.shape_cast %266 : vector<1x32x32xbf16> to vector<32x32xbf16>
    %cst_63 = arith.constant dense<0.000000e+00> : vector<16x32xf32>
    %268 = tpu.matmul %265, %267, %cst_63 {dimension_numbers = #tpu.dot_dimension_numbers<[1], [0], [0], [1], [0, 0, 1, 1], [], []>} : vector<16x32xbf16>, vector<32x32xbf16>, vector<16x32xf32> -> vector<16x32xf32>
    %269 = vector.broadcast %203 : vector<1x32xf32> to vector<16x32xf32>
    %270 = arith.addf %268, %269 : vector<16x32xf32>
    %271 = arith.addf %201, %270 : vector<16x32xf32>
    %cst_64 = arith.constant dense<0.000000e+00> : vector<16xf32>
    %272 = vector.multi_reduction <add>, %271, %cst_64 [1] : vector<16x32xf32> to vector<16xf32>
    %273 = vector.shape_cast %272 : vector<16xf32> to vector<16x1xf32>
    %cst_65 = arith.constant 3.200000e+01 : f32
    %274 = vector.broadcast %cst_65 : f32 to vector<16x1xf32>
    %275 = arith.divf %273, %274 : vector<16x1xf32>
    %276 = vector.broadcast %275 : vector<16x1xf32> to vector<16x32xf32>
    %277 = arith.subf %271, %276 : vector<16x32xf32>
    %278 = arith.mulf %277, %277 : vector<16x32xf32>
    %cst_66 = arith.constant dense<0.000000e+00> : vector<16xf32>
    %279 = vector.multi_reduction <add>, %278, %cst_66 [1] : vector<16x32xf32> to vector<16xf32>
    %280 = vector.shape_cast %279 : vector<16xf32> to vector<16x1xf32>
    %cst_67 = arith.constant 3.200000e+01 : f32
    %281 = vector.broadcast %cst_67 : f32 to vector<16x1xf32>
    %282 = arith.divf %280, %281 : vector<16x1xf32>
    %283 = vector.broadcast %275 : vector<16x1xf32> to vector<16x32xf32>
    %284 = arith.subf %271, %283 : vector<16x32xf32>
    %cst_68 = arith.constant 9.99999996E-13 : f32
    %285 = vector.broadcast %cst_68 : f32 to vector<16x1xf32>
    %286 = arith.addf %282, %285 : vector<16x1xf32>
    %287 = math.rsqrt %286 : vector<16x1xf32>
    %288 = vector.broadcast %287 : vector<16x1xf32> to vector<16x32xf32>
    %289 = arith.mulf %284, %288 : vector<16x32xf32>
    %290 = vector.broadcast %204 : vector<1x32xf32> to vector<16x32xf32>
    %291 = arith.mulf %289, %290 : vector<16x32xf32>
    %292 = vector.broadcast %205 : vector<1x32xf32> to vector<16x32xf32>
    %293 = arith.addf %291, %292 : vector<16x32xf32>
    %294 = arith.truncf %293 : vector<16x32xf32> to vector<16x32xbf16>
    %c1_69 = arith.constant 1 : index
    %c0_70 = arith.constant 0 : index
    %c0_71 = arith.constant 0 : index
    %295 = vector.load %arg6[%c1_69, %c0_70, %c0_71] : memref<2x32x64xbf16, #tpu.memory_space<vmem>>, vector<1x32x64xbf16>
    %296 = vector.shape_cast %295 : vector<1x32x64xbf16> to vector<32x64xbf16>
    %cst_72 = arith.constant dense<0.000000e+00> : vector<16x64xf32>
    %297 = tpu.matmul %294, %296, %cst_72 {dimension_numbers = #tpu.dot_dimension_numbers<[1], [0], [0], [1], [0, 0, 1, 1], [], []>} : vector<16x32xbf16>, vector<32x64xbf16>, vector<16x64xf32> -> vector<16x64xf32>
    %298 = vector.broadcast %206 : vector<1x64xf32> to vector<16x64xf32>
    %299 = arith.addf %297, %298 : vector<16x64xf32>
    %cst_73 = arith.constant 5.000000e-01 : f32
    %300 = vector.broadcast %cst_73 : f32 to vector<16x64xf32>
    %301 = arith.mulf %300, %299 : vector<16x64xf32>
    %cst_74 = arith.constant 4.471500e-02 : f32
    %302 = vector.broadcast %cst_74 : f32 to vector<16x64xf32>
    %303 = arith.mulf %302, %299 : vector<16x64xf32>
    %304 = arith.mulf %303, %299 : vector<16x64xf32>
    %305 = arith.mulf %304, %299 : vector<16x64xf32>
    %306 = arith.addf %299, %305 : vector<16x64xf32>
    %cst_75 = arith.constant 0.797884583 : f32
    %307 = vector.broadcast %cst_75 : f32 to vector<16x64xf32>
    %308 = arith.mulf %307, %306 : vector<16x64xf32>
    %309 = math.tanh %308 : vector<16x64xf32>
    %cst_76 = arith.constant 1.000000e+00 : f32
    %310 = vector.broadcast %cst_76 : f32 to vector<16x64xf32>
    %311 = arith.addf %310, %309 : vector<16x64xf32>
    %312 = arith.mulf %301, %311 : vector<16x64xf32>
    %313 = arith.truncf %312 : vector<16x64xf32> to vector<16x64xbf16>
    %c1_77 = arith.constant 1 : index
    %c0_78 = arith.constant 0 : index
    %c0_79 = arith.constant 0 : index
    %314 = vector.load %arg7[%c1_77, %c0_78, %c0_79] : memref<2x64x32xbf16, #tpu.memory_space<vmem>>, vector<1x64x32xbf16>
    %315 = vector.shape_cast %314 : vector<1x64x32xbf16> to vector<64x32xbf16>
    %cst_80 = arith.constant dense<0.000000e+00> : vector<16x32xf32>
    %316 = tpu.matmul %313, %315, %cst_80 {dimension_numbers = #tpu.dot_dimension_numbers<[1], [0], [0], [1], [0, 0, 1, 1], [], []>} : vector<16x64xbf16>, vector<64x32xbf16>, vector<16x32xf32> -> vector<16x32xf32>
    %317 = vector.broadcast %207 : vector<1x32xf32> to vector<16x32xf32>
    %318 = arith.addf %316, %317 : vector<16x32xf32>
    %319 = arith.addf %293, %318 : vector<16x32xf32>
    %cst_81 = arith.constant dense<0.000000e+00> : vector<16xf32>
    %320 = vector.multi_reduction <add>, %319, %cst_81 [1] : vector<16x32xf32> to vector<16xf32>
    %321 = vector.shape_cast %320 : vector<16xf32> to vector<16x1xf32>
    %cst_82 = arith.constant 3.200000e+01 : f32
    %322 = vector.broadcast %cst_82 : f32 to vector<16x1xf32>
    %323 = arith.divf %321, %322 : vector<16x1xf32>
    %324 = vector.broadcast %323 : vector<16x1xf32> to vector<16x32xf32>
    %325 = arith.subf %319, %324 : vector<16x32xf32>
    %326 = arith.mulf %325, %325 : vector<16x32xf32>
    %cst_83 = arith.constant dense<0.000000e+00> : vector<16xf32>
    %327 = vector.multi_reduction <add>, %326, %cst_83 [1] : vector<16x32xf32> to vector<16xf32>
    %328 = vector.shape_cast %327 : vector<16xf32> to vector<16x1xf32>
    %cst_84 = arith.constant 3.200000e+01 : f32
    %329 = vector.broadcast %cst_84 : f32 to vector<16x1xf32>
    %330 = arith.divf %328, %329 : vector<16x1xf32>
    %331 = vector.broadcast %323 : vector<16x1xf32> to vector<16x32xf32>
    %332 = arith.subf %319, %331 : vector<16x32xf32>
    %cst_85 = arith.constant 9.99999996E-13 : f32
    %333 = vector.broadcast %cst_85 : f32 to vector<16x1xf32>
    %334 = arith.addf %330, %333 : vector<16x1xf32>
    %335 = math.rsqrt %334 : vector<16x1xf32>
    %336 = vector.broadcast %335 : vector<16x1xf32> to vector<16x32xf32>
    %337 = arith.mulf %332, %336 : vector<16x32xf32>
    %338 = vector.broadcast %208 : vector<1x32xf32> to vector<16x32xf32>
    %339 = arith.mulf %337, %338 : vector<16x32xf32>
    %340 = vector.broadcast %209 : vector<1x32xf32> to vector<16x32xf32>
    %341 = arith.addf %339, %340 : vector<16x32xf32>
    %342 = vector.shape_cast %341 : vector<16x32xf32> to vector<2x8x32xf32>
    %343 = vector.extract_strided_slice %342 {offsets = [0, 0, 0], sizes = [2, 1, 32], strides = [1, 1, 1]} : vector<2x8x32xf32> to vector<2x1x32xf32>
    %344 = vector.shape_cast %343 : vector<2x1x32xf32> to vector<2x32xf32>
    %cst_86 = arith.constant 0.000000e+00 : f32
    %345 = vector.broadcast %cst_86 : f32 to vector<6x32xf32>
    %346 = tpu.concatenate %344, %345 in 0 : vector<2x32xf32>, vector<6x32xf32> -> vector<8x32xf32>
    %c0_87 = arith.constant 0 : index
    %c0_88 = arith.constant 0 : index
    %347 = vector.load %arg8[%c0_87, %c0_88] : memref<32x160xbf16, #tpu.memory_space<vmem>>, vector<32x160xbf16>
    %348 = vector.extract_strided_slice %347 {offsets = [0, 0], sizes = [32, 128], strides = [1, 1]} : vector<32x160xbf16> to vector<32x128xbf16>
    %349 = vector.extract_strided_slice %347 {offsets = [0, 128], sizes = [32, 32], strides = [1, 1]} : vector<32x160xbf16> to vector<32x32xbf16>
    %350 = arith.truncf %346 : vector<8x32xf32> to vector<8x32xbf16>
    %cst_89 = arith.constant dense<0.000000e+00> : vector<8x32xf32>
    %351 = tpu.matmul %350, %349, %cst_89 {dimension_numbers = #tpu.dot_dimension_numbers<[1], [0], [0], [1], [0, 0, 1, 1], [], []>} : vector<8x32xbf16>, vector<32x32xbf16>, vector<8x32xf32> -> vector<8x32xf32>
    %352 = vector.broadcast %3 : vector<1x32xf32> to vector<8x32xf32>
    %353 = arith.addf %351, %352 : vector<8x32xf32>
    %354 = math.tanh %353 : vector<8x32xf32>
    %355 = arith.truncf %354 : vector<8x32xf32> to vector<8x32xbf16>
    %cst_90 = arith.constant dense<0.000000e+00> : vector<8x128xf32>
    %356 = tpu.matmul %355, %348, %cst_90 {dimension_numbers = #tpu.dot_dimension_numbers<[1], [0], [0], [1], [0, 0, 1, 1], [], []>} : vector<8x32xbf16>, vector<32x128xbf16>, vector<8x128xf32> -> vector<8x128xf32>
    %357 = vector.broadcast %4 : vector<1x128xf32> to vector<8x128xf32>
    %358 = arith.addf %356, %357 : vector<8x128xf32>
    %c0_91 = arith.constant 0 : index
    %c0_92 = arith.constant 0 : index
    %359 = vector.load %arg10[%c0_91, %c0_92] : memref<8x128xf32, #tpu.memory_space<vmem>>, vector<8x128xf32>
    tpu.vector_store %arg10[%c0_91, %c0_92], %358 {strides = array<i32>} : memref<8x128xf32, #tpu.memory_space<vmem>>, vector<8x128xf32>,
    return
  }
}

</mosaic_0001>

<llo_original>
// kernel: bert_movie_plot_classifier.1
$region0: #{bert_movie_plot_classifier.1}
  #allocation0 [shape = 'u32[]', space=smem, size = 0x4, offset = 0x4, fixed_abs, tag = 'smem constant byte address 0x4 - core index']
  #allocation1 [shape = 'u32[144,128]{1,0:T(1,128)}', space=vmem, size = 0x12000, scoped, tag = 'internal scratch']
  %s0 = inlined_call_operand.vmem [shape: s32[16,2], index: 0, kind: input, shape index: {}]
  %s1 = inlined_call_operand.vmem [shape: f32[2,8], index: 1, kind: input, shape index: {}]
  %s2 = inlined_call_operand.vmem [shape: bf16[128,32], index: 2, kind: input, shape index: {}]
  %s3 = inlined_call_operand.vmem [shape: f32[16,32], index: 3, kind: input, shape index: {}]
  %s4 = inlined_call_operand.vmem [shape: bf16[2,32,96], index: 4, kind: input, shape index: {}]
  %s5 = inlined_call_operand.vmem [shape: bf16[2,32,32], index: 5, kind: input, shape index: {}]
  %s6 = inlined_call_operand.vmem [shape: bf16[2,32,64], index: 6, kind: input, shape index: {}]
  %s7 = inlined_call_operand.vmem [shape: bf16[2,64,32], index: 7, kind: input, shape index: {}]
  %s8 = inlined_call_operand.vmem [shape: bf16[32,160], index: 8, kind: input, shape index: {}]
  %s9 = inlined_call_operand.vmem [shape: f32[24,128], index: 9, kind: input, shape index: {}]
  %s10 = inlined_call_operand.vmem [shape: f32[8,128], index: 10, kind: output, shape index: {}]
  %s11 = sld [smem:[#allocation0]]
  $region50: #{bert_movie_plot_classifier.1} parent=0
    _
  %s13 = ssub.s32 1, %s11
  %s14 = scalar_select 0, %s13, %s11
  // Predicated region
  $region2: #{bert_movie_plot_classifier.1} parent=0 // pred_check
    _
  $region3: #{bert_movie_plot_classifier.1} parent=0 // pred_check_branch
    %16 = sbr.rel (0) target = $region5
  $region4: #{bert_movie_plot_classifier.1} parent=0 // pred_region
    _
  $region5: #{bert_movie_plot_classifier.1} parent=0 // pred_fallthru
    _
  // Predicated region
  $region6: #{bert_movie_plot_classifier.1} parent=0 // pred_check
    _
  $region7: #{bert_movie_plot_classifier.1} parent=0 // pred_check_branch
    %18 = sbr.rel (0) target = $region9
  $region8: #{bert_movie_plot_classifier.1} parent=0 // pred_region
    _
  $region9: #{bert_movie_plot_classifier.1} parent=0 // pred_fallthru
    _
  // Predicated region
  $region10: #{bert_movie_plot_classifier.1} parent=0 // pred_check
    _
  $region11: #{bert_movie_plot_classifier.1} parent=0 // pred_check_branch
    %20 = sbr.rel (0) target = $region13
  $region12: #{bert_movie_plot_classifier.1} parent=0 // pred_region
    _
  $region13: #{bert_movie_plot_classifier.1} parent=0 // pred_fallthru
    _
  // Predicated region
  $region14: #{bert_movie_plot_classifier.1} parent=0 // pred_check
    _
  $region15: #{bert_movie_plot_classifier.1} parent=0 // pred_check_branch
    %22 = sbr.rel (0) target = $region17
  $region16: #{bert_movie_plot_classifier.1} parent=0 // pred_region
    _
  $region17: #{bert_movie_plot_classifier.1} parent=0 // pred_fallthru
    _
  // Predicated region
  $region18: #{bert_movie_plot_classifier.1} parent=0 // pred_check
    _
  $region19: #{bert_movie_plot_classifier.1} parent=0 // pred_check_branch
    %24 = sbr.rel (0) target = $region21
  $region20: #{bert_movie_plot_classifier.1} parent=0 // pred_region
    _
  $region21: #{bert_movie_plot_classifier.1} parent=0 // pred_fallthru
    _
  // Predicated region
  $region22: #{bert_movie_plot_classifier.1} parent=0 // pred_check
    _
  $region23: #{bert_movie_plot_classifier.1} parent=0 // pred_check_branch
    %26 = sbr.rel (0) target = $region25
  $region24: #{bert_movie_plot_classifier.1} parent=0 // pred_region
    _
  $region25: #{bert_movie_plot_classifier.1} parent=0 // pred_fallthru
    _
  // Predicated region
  $region26: #{bert_movie_plot_classifier.1} parent=0 // pred_check
    _
  $region27: #{bert_movie_plot_classifier.1} parent=0 // pred_check_branch
    %28 = sbr.rel (0) target = $region29
  $region28: #{bert_movie_plot_classifier.1} parent=0 // pred_region
    _
  $region29: #{bert_movie_plot_classifier.1} parent=0 // pred_fallthru
    _
  // Predicated region
  $region30: #{bert_movie_plot_classifier.1} parent=0 // pred_check
    _
  $region31: #{bert_movie_plot_classifier.1} parent=0 // pred_check_branch
    %30 = sbr.rel (0) target = $region33
  $region32: #{bert_movie_plot_classifier.1} parent=0 // pred_region
    _
  $region33: #{bert_movie_plot_classifier.1} parent=0 // pred_fallthru
    _
  // Predicated region
  $region34: #{bert_movie_plot_classifier.1} parent=0 // pred_check
    _
  $region35: #{bert_movie_plot_classifier.1} parent=0 // pred_check_branch
    %32 = sbr.rel (0) target = $region37
  $region36: #{bert_movie_plot_classifier.1} parent=0 // pred_region
    _
  $region37: #{bert_movie_plot_classifier.1} parent=0 // pred_fallthru
    _
  // Predicated region
  $region38: #{bert_movie_plot_classifier.1} parent=0 // pred_check
    _
  $region39: #{bert_movie_plot_classifier.1} parent=0 // pred_check_branch
    %34 = sbr.rel (0) target = $region41
  $region40: #{bert_movie_plot_classifier.1} parent=0 // pred_region
    _
  $region41: #{bert_movie_plot_classifier.1} parent=0 // pred_fallthru
    _
  %v36 = vld [vmem:[%s9] sm:$0xff]
  %v37 = vld [vmem:[%s9 + $0x8] sm:$0xff]
  %v38 = vld [vmem:[%s9 + $0x10] sm:$0xff]
  %v39 = vld [vmem:[%s0] sm:$0xff]
  %v40 = vld [vmem:[%s0 + $0x8] sm:$0xff]
  %v41 = vcvt.s32.f32 %v39
  %v42 = vcvt.s32.f32 %v40
  %v43 = vlaneseq
  %v44 = vand.u32 %v43, 127
  %45 = vset.pattern.permute.xlu0 0
  %46 = vperm.xlu0 %45, %v39
  %v47 = vpop.permute.xlu0 %46
  %48 = vset.pattern.permute.xlu0 0
  %49 = vperm.xlu0 %48, %v40
  %v50 = vpop.permute.xlu0 %49
  %vm51 = vcmp.eq.s32.totalorder %v47, %v44
  %vm52 = vcmp.eq.s32.totalorder %v50, %v44
  %v53 = vsel %vm51, 1, 0
  %v54 = vsel %vm52, 1, 0
  %v55 = vcvt.s32.f32 %v53
  %v56 = vcvt.s32.f32 %v54
  %v57 = vpack.c.bf16 %v56, %v55
  %v58 = vld [vmem:[%s2] sm:$0xf]
  %v59 = vld [vmem:[%s2 + $0x4] sm:$0xf]
  %v60 = vld [vmem:[%s2 + $0x8] sm:$0xf]
  %v61 = vld [vmem:[%s2 + $0xc] sm:$0xf]
  %v62 = vld [vmem:[%s2 + $0x10] sm:$0xf]
  %v63 = vld [vmem:[%s2 + $0x14] sm:$0xf]
  %v64 = vld [vmem:[%s2 + $0x18] sm:$0xf]
  %v65 = vld [vmem:[%s2 + $0x1c] sm:$0xf]
  %v66 = vld [vmem:[%s2 + $0x20] sm:$0xf]
  %v67 = vld [vmem:[%s2 + $0x24] sm:$0xf]
  %v68 = vld [vmem:[%s2 + $0x28] sm:$0xf]
  %v69 = vld [vmem:[%s2 + $0x2c] sm:$0xf]
  %v70 = vld [vmem:[%s2 + $0x30] sm:$0xf]
  %v71 = vld [vmem:[%s2 + $0x34] sm:$0xf]
  %v72 = vld [vmem:[%s2 + $0x38] sm:$0xf]
  %v73 = vld [vmem:[%s2 + $0x3c] sm:$0xf]
  %v74 = vsub.f32 1.0, %v41
  %v75 = vsub.f32 1.0, %v42
  %v76 = vlaneseq
  %v77 = vshrl.u32 %v76, 7
  %v78 = vsub.s32 4, %v77
  %v79 = vrot.slane %v36, %v78
  %81 = vset.pattern.permute.xlu0 1
  %82 = vperm.xlu0 %81, %v74
  %v83 = vpop.permute.xlu0 %82
  %86 = vset.pattern.permute.xlu0 1
  %87 = vperm.xlu0 %86, %v75
  %v88 = vpop.permute.xlu0 %87
  %v90 = vmul.f32 %v79, %v83
  %v91 = vmul.f32 %v79, %v88
  %v92 = vlaneseq
  %v93 = vshrl.u32 %v92, 7
  %v94 = vsub.s32 5, %v93
  %v95 = vrot.slane %v36, %v94
  %97 = vset.pattern.permute.xlu0 1
  %98 = vperm.xlu0 %97, %v41
  %v99 = vpop.permute.xlu0 %98
  %102 = vset.pattern.permute.xlu0 1
  %103 = vperm.xlu0 %102, %v42
  %v104 = vpop.permute.xlu0 %103
  %v106 = vmul.f32 %v95, %v99
  %v107 = vmul.f32 %v95, %v104
  %v108 = vadd.f32 %v90, %v106
  %v109 = vadd.f32 %v91, %v107
  %v110 = vld [vmem:[%s3] sm:$0xff]
  %v111 = vld [vmem:[%s3 + $0x8] sm:$0xff]
  %v128 = vunpack.c.l.b16 %v58
  %v129 = vunpack.c.l.b16 %v59
  %v130 = vunpack.c.l.b16 %v60
  %v131 = vunpack.c.l.b16 %v61
  %v132 = vunpack.c.l.b16 %v62
  %v133 = vunpack.c.l.b16 %v63
  %v134 = vunpack.c.l.b16 %v64
  %v135 = vunpack.c.l.b16 %v65
  %v136 = vunpack.c.l.b16 %v66
  %v137 = vunpack.c.l.b16 %v67
  %v138 = vunpack.c.l.b16 %v68
  %v139 = vunpack.c.l.b16 %v69
  %v140 = vunpack.c.l.b16 %v70
  %v141 = vunpack.c.l.b16 %v71
  %v142 = vunpack.c.l.b16 %v72
  %v143 = vunpack.c.l.b16 %v73
  %v144 = vpack.c.b16 %v129, %v128
  %v145 = vpack.c.b16 %v131, %v130
  %v146 = vpack.c.b16 %v133, %v132
  %v147 = vpack.c.b16 %v135, %v134
  %v148 = vpack.c.b16 %v137, %v136
  %v149 = vpack.c.b16 %v139, %v138
  %v150 = vpack.c.b16 %v141, %v140
  %v151 = vpack.c.b16 %v143, %v142
  %160 = vmatprep.subr.bf16.mxu0 0
  %161 = vmatpush1.bf16.msra.mxu0 %v144
  %162 = vmatprep.subr.bf16.mxu0 0
  %163 = vmatpush1.bf16.msra.mxu0 %v145
  %164 = vmatprep.subr.bf16.mxu0 0
  %165 = vmatpush1.bf16.msra.mxu0 %v146
  %166 = vmatprep.subr.bf16.mxu0 0
  %167 = vmatpush1.bf16.msra.mxu0 %v147
  %168 = vmatprep.subr.bf16.mxu0 0
  %169 = vmatpush1.bf16.msra.mxu0 %v148
  %170 = vmatprep.subr.bf16.mxu0 0
  %171 = vmatpush1.bf16.msra.mxu0 %v149
  %172 = vmatprep.subr.bf16.mxu0 0
  %173 = vmatpush1.bf16.msra.mxu0 %v150
  %174 = vmatprep.subr.bf16.mxu0 0
  %175 = vmatpush1.bf16.msra.mxu0 %v151
  %176 = vmatprep.subr.bf16.mxu0 0
  %177 = vmatpush1.bf16.msra.mxu0 0
  %178 = vmatprep.subr.bf16.mxu0 0
  %179 = vmatpush1.bf16.msra.mxu0 0
  %180 = vmatprep.subr.bf16.mxu0 0
  %181 = vmatpush1.bf16.msra.mxu0 0
  %182 = vmatprep.subr.bf16.mxu0 0
  %183 = vmatpush1.bf16.msra.mxu0 0
  %184 = vmatprep.subr.bf16.mxu0 0
  %185 = vmatpush1.bf16.msra.mxu0 0
  %186 = vmatprep.subr.bf16.mxu0 0
  %187 = vmatpush1.bf16.msra.mxu0 0
  %188 = vmatprep.subr.bf16.mxu0 0
  %189 = vmatpush1.bf16.msra.mxu0 0
  %190 = vmatprep.subr.bf16.mxu0 0
  %191 = vmatpush1.bf16.msra.mxu0 0
  %192 = vmatprep.mubr.bf16.mxu0 0
  %193 = vmatmul.mubr.bf16.gmra.mrb[0].mxu0 %v57
  %v194 = vpop.f32.mrb[0].mxu0
  %v195 = vadd.f32 %v110, %v194
  %v196 = vpop.f32.mrb[0].mxu0
  %v197 = vpop.f32.mrb[0].mxu0
  %v198 = vadd.f32 %v111, %v197
  %v199 = vpop.f32.mrb[0].mxu0
  %200 = vdwg.mxu0
  %v201 = vadd.f32 %v195, %v108
  %v202 = vadd.f32 %v198, %v109
  %vm203 = vcmask 261120
  %v204 = vsel %vm203, %v201, 0.0
  %205 = vadd.xlane.f32.xlu0 %v204
  %v206 = vpop.xlane.xlu0 %205
  %v207 = vsel %vm203, %v202, 0.0
  %208 = vadd.xlane.f32.xlu0 %v207
  %v209 = vpop.xlane.xlu0 %208
  %v210 = vrcp.pop 32.0
  %v211 = vmul.f32 %v206, %v210
  %v212 = vmul.f32 %v209, %v210
  %v213 = vsub.f32 %v201, %v211
  %v214 = vsub.f32 %v202, %v212
  %v215 = vmul.f32 %v213, %v213
  %v216 = vmul.f32 %v214, %v214
  %v217 = vsel %vm203, %v215, 0.0
  %218 = vadd.xlane.f32.xlu0 %v217
  %v219 = vpop.xlane.xlu0 %218
  %v220 = vsel %vm203, %v216, 0.0
  %221 = vadd.xlane.f32.xlu0 %v220
  %v222 = vpop.xlane.xlu0 %221
  %v223 = vmul.f32 %v219, %v210
  %v224 = vmul.f32 %v222, %v210
  %v225 = vadd.f32 %v223, 1e-12
  %v226 = vadd.f32 %v224, 1e-12
  %v227 = vrsqrt.pop %v225
  %v228 = vrsqrt.pop %v226
  %v229 = vmul.f32 %v213, %v227
  %v230 = vmul.f32 %v214, %v228
  %v231 = vlaneseq
  %v232 = vshrl.u32 %v231, 7
  %v233 = vsub.s32 0, %v232
  %v234 = vrot.slane %v36, %v233
  %v235 = vmul.f32 %v229, %v234
  %v236 = vmul.f32 %v230, %v234
  %v237 = vlaneseq
  %v238 = vshrl.u32 %v237, 7
  %v239 = vsub.s32 1, %v238
  %v240 = vrot.slane %v36, %v239
  %v241 = vadd.f32 %v235, %v240
  %v242 = vadd.f32 %v236, %v240
  %v243 = vld [vmem:[%s1] sm:$0x3]
  %v244 = vsub.f32 1.0, %v243
  %v245 = vmul.f32 %v244, -10000.0
  %v248 = vunpack.c.l.s4 1966171168
  %v249 = vunpack.c.0.s8 %v248
  %v250 = vlaneseq
  %v251 = vshrl.u32 %v250, 7
  %v252 = vsub.s32 %v249, %v251
  %v253 = vrot.slane %v245, %v252
  %v254 = vcombine.high %v253, %v253
  %v256 = vunpack.c.l.s4 1966171168
  %v257 = vunpack.c.0.s8 %v256
  %v258 = vlaneseq
  %v259 = vshrl.u32 %v258, 7
  %v260 = vsub.s32 %v257, %v259
  %v261 = vrot.slane %v253, %v260
  %v263 = vunpack.c.l.s4 1966171168
  %v264 = vunpack.c.0.s8 %v263
  %v265 = vlaneseq
  %v266 = vshrl.u32 %v265, 7
  %v267 = vsub.s32 %v264, %v266
  %v268 = vrot.slane %v254, %v267
  %v269 = vpack.c.bf16 %v242, %v241
  %v270 = vld [vmem:[%s4] sm:$0xf]
  %v271 = vld [vmem:[%s4 + $0x4] sm:$0xf]
  %v272 = vld [vmem:[%s4 + $0x8] sm:$0xf]
  %v273 = vld [vmem:[%s4 + $0xc] sm:$0xf]
  %v274 = vlaneseq
  %v275 = vshrl.u32 %v274, 7
  %v276 = vsub.s32 0, %v275
  %v277 = vrot.slane %v37, %v276
  %v282 = vunpack.c.l.b16 %v270
  %v283 = vunpack.c.l.b16 %v271
  %v284 = vunpack.c.l.b16 %v272
  %v285 = vunpack.c.l.b16 %v273
  %v286 = vpack.c.b16 %v283, %v282
  %v287 = vpack.c.b16 %v285, %v284
  %v291 = vsel %vm203, %v269, 0
  %293 = vmatprep.subr.bf16.mxu0 0
  %294 = vmatpush1.bf16.msra.mxu0 %v286
  %295 = vmatprep.subr.bf16.mxu0 0
  %296 = vmatpush1.bf16.msra.mxu0 %v287
  %297 = vmatprep.subr.bf16.mxu0 0
  %298 = vmatpush1.bf16.msra.mxu0 0
  %299 = vmatprep.subr.bf16.mxu0 0
  %300 = vmatpush1.bf16.msra.mxu0 0
  %301 = vmatprep.subr.bf16.mxu0 0
  %302 = vmatpush1.bf16.msra.mxu0 0
  %303 = vmatprep.subr.bf16.mxu0 0
  %304 = vmatpush1.bf16.msra.mxu0 0
  %305 = vmatprep.subr.bf16.mxu0 0
  %306 = vmatpush1.bf16.msra.mxu0 0
  %307 = vmatprep.subr.bf16.mxu0 0
  %308 = vmatpush1.bf16.msra.mxu0 0
  %309 = vmatprep.subr.bf16.mxu0 0
  %310 = vmatpush1.bf16.msra.mxu0 0
  %311 = vmatprep.subr.bf16.mxu0 0
  %312 = vmatpush1.bf16.msra.mxu0 0
  %313 = vmatprep.subr.bf16.mxu0 0
  %314 = vmatpush1.bf16.msra.mxu0 0
  %315 = vmatprep.subr.bf16.mxu0 0
  %316 = vmatpush1.bf16.msra.mxu0 0
  %317 = vmatprep.subr.bf16.mxu0 0
  %318 = vmatpush1.bf16.msra.mxu0 0
  %319 = vmatprep.subr.bf16.mxu0 0
  %320 = vmatpush1.bf16.msra.mxu0 0
  %321 = vmatprep.subr.bf16.mxu0 0
  %322 = vmatpush1.bf16.msra.mxu0 0
  %323 = vmatprep.subr.bf16.mxu0 0
  %324 = vmatpush1.bf16.msra.mxu0 0
  %325 = vmatprep.mubr.bf16.mxu0 0
  %326 = vmatmul.mubr.bf16.gmra.mrb[0].mxu0 %v291
  %v327 = vpop.f32.mrb[0].mxu0
  %v328 = vadd.f32 %v277, %v327
  %v329 = vpop.f32.mrb[0].mxu0
  %v330 = vpop.f32.mrb[0].mxu0
  %v331 = vadd.f32 %v277, %v330
  %v332 = vpop.f32.mrb[0].mxu0
  %333 = vdwg.mxu0
  %v334 = vmul.f32 %v328, 0.25
  %v335 = vmul.f32 %v331, 0.25
  %338 = vrot.lane.b32.xlu0 %v334, 112
  %v339 = vpop.permute.xlu0 %338
  %340 = vrot.lane.b32.xlu0 %v335, 112
  %v341 = vpop.permute.xlu0 %340
  %v344 = vpack.c.bf16 %v334, %v334
  %v345 = vpack.c.bf16 %v339, %v339
  %v346 = vpack.c.bf16 %v335, %v335
  %v347 = vpack.c.bf16 %v341, %v341
  %350 = vrot.lane.b32.xlu0 %v328, 112
  %v351 = vpop.permute.xlu0 %350
  %352 = vrot.lane.b32.xlu0 %v331, 112
  %v353 = vpop.permute.xlu0 %352
  %v356 = vpack.c.bf16 %v328, %v328
  %v357 = vpack.c.bf16 %v351, %v351
  %v358 = vpack.c.bf16 %v331, %v331
  %v359 = vpack.c.bf16 %v353, %v353
  %v360 = vlaneseq
  %v361 = vshrl.u32 %v360, 7
  %v362 = vsub.s32 0, %v361
  %v363 = vrot.slane %v261, %v362
  %v364 = vlaneseq
  %v365 = vshrl.u32 %v364, 7
  %v366 = vsub.s32 0, %v365
  %v367 = vrot.slane %v268, %v366
  %371 = vrot.lane.b32.xlu0 %v356, 96
  %v372 = vpop.permute.xlu0 %371
  %vm373 = vcmask 130048
  %v375 = vsel %vm373, %v344, 0
  %v378 = vsel %vm373, %v372, 0
  %380 = vmatprep.subr.bf16.mxu0 0
  %381 = vmatpush1.bf16.xpose.msra.mxu0 %v378
  %382 = vmatprep.subr.bf16.mxu0 0
  %383 = vmatpush1.bf16.xpose.msra.mxu0 0
  %384 = vmatprep.subr.bf16.mxu0 0
  %385 = vmatpush1.bf16.xpose.msra.mxu0 0
  %386 = vmatprep.subr.bf16.mxu0 0
  %387 = vmatpush1.bf16.xpose.msra.mxu0 0
  %388 = vmatprep.subr.bf16.mxu0 0
  %389 = vmatpush1.bf16.xpose.msra.mxu0 0
  %390 = vmatprep.subr.bf16.mxu0 0
  %391 = vmatpush1.bf16.xpose.msra.mxu0 0
  %392 = vmatprep.subr.bf16.mxu0 0
  %393 = vmatpush1.bf16.xpose.msra.mxu0 0
  %394 = vmatprep.subr.bf16.mxu0 0
  %395 = vmatpush1.bf16.xpose.msra.mxu0 0
  %396 = vmatprep.subr.bf16.mxu0 0
  %397 = vmatpush1.bf16.xpose.msra.mxu0 0
  %398 = vmatprep.subr.bf16.mxu0 0
  %399 = vmatpush1.bf16.xpose.msra.mxu0 0
  %400 = vmatprep.subr.bf16.mxu0 0
  %401 = vmatpush1.bf16.xpose.msra.mxu0 0
  %402 = vmatprep.subr.bf16.mxu0 0
  %403 = vmatpush1.bf16.xpose.msra.mxu0 0
  %404 = vmatprep.subr.bf16.mxu0 0
  %405 = vmatpush1.bf16.xpose.msra.mxu0 0
  %406 = vmatprep.subr.bf16.mxu0 0
  %407 = vmatpush1.bf16.xpose.msra.mxu0 0
  %408 = vmatprep.subr.bf16.mxu0 0
  %409 = vmatpush1.bf16.xpose.msra.mxu0 0
  %410 = vmatprep.subr.bf16.mxu0 0
  %411 = vmatpush1.bf16.xpose.msra.mxu0 0
  %412 = vmatprep.mubr.bf16.mxu0 0
  %413 = vmatmul.mubr.bf16.gmra.mrb[0].mxu0 %v375
  %v414 = vpop.f32.mrb[0].mxu0
  %v415 = vadd.f32 %v363, %v414
  %v416 = vpop.f32.mrb[0].mxu0
  %v417 = vpop.f32.mrb[0].mxu0
  %v418 = vpop.f32.mrb[0].mxu0
  %419 = vdwg.mxu0
  %421 = vrot.lane.b32.xlu0 %v357, 96
  %v422 = vpop.permute.xlu0 %421
  %v424 = vsel %vm373, %v345, 0
  %v427 = vsel %vm373, %v422, 0
  %429 = vmatprep.subr.bf16.mxu0 0
  %430 = vmatpush1.bf16.xpose.msra.mxu0 %v427
  %431 = vmatprep.subr.bf16.mxu0 0
  %432 = vmatpush1.bf16.xpose.msra.mxu0 0
  %433 = vmatprep.subr.bf16.mxu0 0
  %434 = vmatpush1.bf16.xpose.msra.mxu0 0
  %435 = vmatprep.subr.bf16.mxu0 0
  %436 = vmatpush1.bf16.xpose.msra.mxu0 0
  %437 = vmatprep.subr.bf16.mxu0 0
  %438 = vmatpush1.bf16.xpose.msra.mxu0 0
  %439 = vmatprep.subr.bf16.mxu0 0
  %440 = vmatpush1.bf16.xpose.msra.mxu0 0
  %441 = vmatprep.subr.bf16.mxu0 0
  %442 = vmatpush1.bf16.xpose.msra.mxu0 0
  %443 = vmatprep.subr.bf16.mxu0 0
  %444 = vmatpush1.bf16.xpose.msra.mxu0 0
  %445 = vmatprep.subr.bf16.mxu0 0
  %446 = vmatpush1.bf16.xpose.msra.mxu0 0
  %447 = vmatprep.subr.bf16.mxu0 0
  %448 = vmatpush1.bf16.xpose.msra.mxu0 0
  %449 = vmatprep.subr.bf16.mxu0 0
  %450 = vmatpush1.bf16.xpose.msra.mxu0 0
  %451 = vmatprep.subr.bf16.mxu0 0
  %452 = vmatpush1.bf16.xpose.msra.mxu0 0
  %453 = vmatprep.subr.bf16.mxu0 0
  %454 = vmatpush1.bf16.xpose.msra.mxu0 0
  %455 = vmatprep.subr.bf16.mxu0 0
  %456 = vmatpush1.bf16.xpose.msra.mxu0 0
  %457 = vmatprep.subr.bf16.mxu0 0
  %458 = vmatpush1.bf16.xpose.msra.mxu0 0
  %459 = vmatprep.subr.bf16.mxu0 0
  %460 = vmatpush1.bf16.xpose.msra.mxu0 0
  %461 = vmatprep.mubr.bf16.mxu0 0
  %462 = vmatmul.mubr.bf16.gmra.mrb[0].mxu0 %v424
  %v463 = vpop.f32.mrb[0].mxu0
  %v464 = vadd.f32 %v363, %v463
  %v465 = vpop.f32.mrb[0].mxu0
  %v466 = vpop.f32.mrb[0].mxu0
  %v467 = vpop.f32.mrb[0].mxu0
  %468 = vdwg.mxu0
  %470 = vrot.lane.b32.xlu0 %v358, 96
  %v471 = vpop.permute.xlu0 %470
  %v473 = vsel %vm373, %v346, 0
  %v476 = vsel %vm373, %v471, 0
  %478 = vmatprep.subr.bf16.mxu0 0
  %479 = vmatpush1.bf16.xpose.msra.mxu0 %v476
  %480 = vmatprep.subr.bf16.mxu0 0
  %481 = vmatpush1.bf16.xpose.msra.mxu0 0
  %482 = vmatprep.subr.bf16.mxu0 0
  %483 = vmatpush1.bf16.xpose.msra.mxu0 0
  %484 = vmatprep.subr.bf16.mxu0 0
  %485 = vmatpush1.bf16.xpose.msra.mxu0 0
  %486 = vmatprep.subr.bf16.mxu0 0
  %487 = vmatpush1.bf16.xpose.msra.mxu0 0
  %488 = vmatprep.subr.bf16.mxu0 0
  %489 = vmatpush1.bf16.xpose.msra.mxu0 0
  %490 = vmatprep.subr.bf16.mxu0 0
  %491 = vmatpush1.bf16.xpose.msra.mxu0 0
  %492 = vmatprep.subr.bf16.mxu0 0
  %493 = vmatpush1.bf16.xpose.msra.mxu0 0
  %494 = vmatprep.subr.bf16.mxu0 0
  %495 = vmatpush1.bf16.xpose.msra.mxu0 0
  %496 = vmatprep.subr.bf16.mxu0 0
  %497 = vmatpush1.bf16.xpose.msra.mxu0 0
  %498 = vmatprep.subr.bf16.mxu0 0
  %499 = vmatpush1.bf16.xpose.msra.mxu0 0
  %500 = vmatprep.subr.bf16.mxu0 0
  %501 = vmatpush1.bf16.xpose.msra.mxu0 0
  %502 = vmatprep.subr.bf16.mxu0 0
  %503 = vmatpush1.bf16.xpose.msra.mxu0 0
  %504 = vmatprep.subr.bf16.mxu0 0
  %505 = vmatpush1.bf16.xpose.msra.mxu0 0
  %506 = vmatprep.subr.bf16.mxu0 0
  %507 = vmatpush1.bf16.xpose.msra.mxu0 0
  %508 = vmatprep.subr.bf16.mxu0 0
  %509 = vmatpush1.bf16.xpose.msra.mxu0 0
  %510 = vmatprep.mubr.bf16.mxu0 0
  %511 = vmatmul.mubr.bf16.gmra.mrb[0].mxu0 %v473
  %v512 = vpop.f32.mrb[0].mxu0
  %v513 = vadd.f32 %v367, %v512
  %v514 = vpop.f32.mrb[0].mxu0
  %v515 = vpop.f32.mrb[0].mxu0
  %v516 = vpop.f32.mrb[0].mxu0
  %517 = vdwg.mxu0
  %519 = vrot.lane.b32.xlu0 %v359, 96
  %v520 = vpop.permute.xlu0 %519
  %v522 = vsel %vm373, %v347, 0
  %v525 = vsel %vm373, %v520, 0
  %527 = vmatprep.subr.bf16.mxu0 0
  %528 = vmatpush1.bf16.xpose.msra.mxu0 %v525
  %529 = vmatprep.subr.bf16.mxu0 0
  %530 = vmatpush1.bf16.xpose.msra.mxu0 0
  %531 = vmatprep.subr.bf16.mxu0 0
  %532 = vmatpush1.bf16.xpose.msra.mxu0 0
  %533 = vmatprep.subr.bf16.mxu0 0
  %534 = vmatpush1.bf16.xpose.msra.mxu0 0
  %535 = vmatprep.subr.bf16.mxu0 0
  %536 = vmatpush1.bf16.xpose.msra.mxu0 0
  %537 = vmatprep.subr.bf16.mxu0 0
  %538 = vmatpush1.bf16.xpose.msra.mxu0 0
  %539 = vmatprep.subr.bf16.mxu0 0
  %540 = vmatpush1.bf16.xpose.msra.mxu0 0
  %541 = vmatprep.subr.bf16.mxu0 0
  %542 = vmatpush1.bf16.xpose.msra.mxu0 0
  %543 = vmatprep.subr.bf16.mxu0 0
  %544 = vmatpush1.bf16.xpose.msra.mxu0 0
  %545 = vmatprep.subr.bf16.mxu0 0
  %546 = vmatpush1.bf16.xpose.msra.mxu0 0
  %547 = vmatprep.subr.bf16.mxu0 0
  %548 = vmatpush1.bf16.xpose.msra.mxu0 0
  %549 = vmatprep.subr.bf16.mxu0 0
  %550 = vmatpush1.bf16.xpose.msra.mxu0 0
  %551 = vmatprep.subr.bf16.mxu0 0
  %552 = vmatpush1.bf16.xpose.msra.mxu0 0
  %553 = vmatprep.subr.bf16.mxu0 0
  %554 = vmatpush1.bf16.xpose.msra.mxu0 0
  %555 = vmatprep.subr.bf16.mxu0 0
  %556 = vmatpush1.bf16.xpose.msra.mxu0 0
  %557 = vmatprep.subr.bf16.mxu0 0
  %558 = vmatpush1.bf16.xpose.msra.mxu0 0
  %559 = vmatprep.mubr.bf16.mxu0 0
  %560 = vmatmul.mubr.bf16.gmra.mrb[0].mxu0 %v522
  %v561 = vpop.f32.mrb[0].mxu0
  %v562 = vadd.f32 %v367, %v561
  %v563 = vpop.f32.mrb[0].mxu0
  %v564 = vpop.f32.mrb[0].mxu0
  %v565 = vpop.f32.mrb[0].mxu0
  %566 = vdwg.mxu0
  %vm567 = vcmask 64512
  %v568 = vsel %vm567, %v415, -inf
  %569 = vmax.xlane.f32.xlu0 %v568
  %v570 = vpop.xlane.xlu0 %569
  %v571 = vsel %vm567, %v464, -inf
  %572 = vmax.xlane.f32.xlu0 %v571
  %v573 = vpop.xlane.xlu0 %572
  %v574 = vsel %vm567, %v513, -inf
  %575 = vmax.xlane.f32.xlu0 %v574
  %v576 = vpop.xlane.xlu0 %575
  %v577 = vsel %vm567, %v562, -inf
  %578 = vmax.xlane.f32.xlu0 %v577
  %v579 = vpop.xlane.xlu0 %578
  %v580 = vsub.f32 %v415, %v570
  %v581 = vsub.f32 %v464, %v573
  %v582 = vsub.f32 %v513, %v576
  %v583 = vsub.f32 %v562, %v579
  %v584 = vmul.f32 %v580, 1.442695
  %v585 = vpow.pop %v584
  %v586 = vmul.f32 %v581, 1.442695
  %v587 = vpow.pop %v586
  %v588 = vmul.f32 %v582, 1.442695
  %v589 = vpow.pop %v588
  %v590 = vmul.f32 %v583, 1.442695
  %v591 = vpow.pop %v590
  %v592 = vsel %vm567, %v585, 0.0
  %593 = vadd.xlane.f32.xlu0 %v592
  %v594 = vpop.xlane.xlu0 %593
  %v595 = vsel %vm567, %v587, 0.0
  %596 = vadd.xlane.f32.xlu0 %v595
  %v597 = vpop.xlane.xlu0 %596
  %v598 = vsel %vm567, %v589, 0.0
  %599 = vadd.xlane.f32.xlu0 %v598
  %v600 = vpop.xlane.xlu0 %599
  %v601 = vsel %vm567, %v591, 0.0
  %602 = vadd.xlane.f32.xlu0 %v601
  %v603 = vpop.xlane.xlu0 %602
  %v604 = vrcp.pop %v594
  %v605 = vrcp.pop %v597
  %v606 = vrcp.pop %v600
  %v607 = vrcp.pop %v603
  %v608 = vmul.f32 %v585, %v604
  %v609 = vmul.f32 %v587, %v605
  %v610 = vmul.f32 %v589, %v606
  %v611 = vmul.f32 %v591, %v607
  %v612 = vpack.c.bf16 %v608, %v608
  %v613 = vpack.c.bf16 %v609, %v609
  %v614 = vpack.c.bf16 %v610, %v610
  %v615 = vpack.c.bf16 %v611, %v611
  %616 = vrot.lane.b32.xlu0 %v356, 64
  %v617 = vpop.permute.xlu0 %616
  %v619 = vsel %vm567, %v612, 0
  %vm621 = vcmask 1043456
  %v623 = vsel %vm621, %v617, 0
  %625 = vmatprep.subr.bf16.mxu0 0
  %626 = vmatpush1.bf16.msra.mxu0 %v623
  %627 = vmatprep.subr.bf16.mxu0 0
  %628 = vmatpush1.bf16.msra.mxu0 0
  %629 = vmatprep.subr.bf16.mxu0 0
  %630 = vmatpush1.bf16.msra.mxu0 0
  %631 = vmatprep.subr.bf16.mxu0 0
  %632 = vmatpush1.bf16.msra.mxu0 0
  %633 = vmatprep.subr.bf16.mxu0 0
  %634 = vmatpush1.bf16.msra.mxu0 0
  %635 = vmatprep.subr.bf16.mxu0 0
  %636 = vmatpush1.bf16.msra.mxu0 0
  %637 = vmatprep.subr.bf16.mxu0 0
  %638 = vmatpush1.bf16.msra.mxu0 0
  %639 = vmatprep.subr.bf16.mxu0 0
  %640 = vmatpush1.bf16.msra.mxu0 0
  %641 = vmatprep.subr.bf16.mxu0 0
  %642 = vmatpush1.bf16.msra.mxu0 0
  %643 = vmatprep.subr.bf16.mxu0 0
  %644 = vmatpush1.bf16.msra.mxu0 0
  %645 = vmatprep.subr.bf16.mxu0 0
  %646 = vmatpush1.bf16.msra.mxu0 0
  %647 = vmatprep.subr.bf16.mxu0 0
  %648 = vmatpush1.bf16.msra.mxu0 0
  %649 = vmatprep.subr.bf16.mxu0 0
  %650 = vmatpush1.bf16.msra.mxu0 0
  %651 = vmatprep.subr.bf16.mxu0 0
  %652 = vmatpush1.bf16.msra.mxu0 0
  %653 = vmatprep.subr.bf16.mxu0 0
  %654 = vmatpush1.bf16.msra.mxu0 0
  %655 = vmatprep.subr.bf16.mxu0 0
  %656 = vmatpush1.bf16.msra.mxu0 0
  %657 = vmatprep.mubr.bf16.mxu0 0
  %658 = vmatmul.mubr.bf16.gmra.mrb[0].mxu0 %v619
  %v659 = vpop.f32.mrb[0].mxu0
  %v660 = vadd.f32 0.0, %v659
  %v661 = vpop.f32.mrb[0].mxu0
  %v662 = vpop.f32.mrb[0].mxu0
  %v663 = vpop.f32.mrb[0].mxu0
  %664 = vdwg.mxu0
  %665 = vrot.lane.b32.xlu0 %v357, 64
  %v666 = vpop.permute.xlu0 %665
  %v668 = vsel %vm567, %v613, 0
  %v671 = vsel %vm621, %v666, 0
  %673 = vmatprep.subr.bf16.mxu0 0
  %674 = vmatpush1.bf16.msra.mxu0 %v671
  %675 = vmatprep.subr.bf16.mxu0 0
  %676 = vmatpush1.bf16.msra.mxu0 0
  %677 = vmatprep.subr.bf16.mxu0 0
  %678 = vmatpush1.bf16.msra.mxu0 0
  %679 = vmatprep.subr.bf16.mxu0 0
  %680 = vmatpush1.bf16.msra.mxu0 0
  %681 = vmatprep.subr.bf16.mxu0 0
  %682 = vmatpush1.bf16.msra.mxu0 0
  %683 = vmatprep.subr.bf16.mxu0 0
  %684 = vmatpush1.bf16.msra.mxu0 0
  %685 = vmatprep.subr.bf16.mxu0 0
  %686 = vmatpush1.bf16.msra.mxu0 0
  %687 = vmatprep.subr.bf16.mxu0 0
  %688 = vmatpush1.bf16.msra.mxu0 0
  %689 = vmatprep.subr.bf16.mxu0 0
  %690 = vmatpush1.bf16.msra.mxu0 0
  %691 = vmatprep.subr.bf16.mxu0 0
  %692 = vmatpush1.bf16.msra.mxu0 0
  %693 = vmatprep.subr.bf16.mxu0 0
  %694 = vmatpush1.bf16.msra.mxu0 0
  %695 = vmatprep.subr.bf16.mxu0 0
  %696 = vmatpush1.bf16.msra.mxu0 0
  %697 = vmatprep.subr.bf16.mxu0 0
  %698 = vmatpush1.bf16.msra.mxu0 0
  %699 = vmatprep.subr.bf16.mxu0 0
  %700 = vmatpush1.bf16.msra.mxu0 0
  %701 = vmatprep.subr.bf16.mxu0 0
  %702 = vmatpush1.bf16.msra.mxu0 0
  %703 = vmatprep.subr.bf16.mxu0 0
  %704 = vmatpush1.bf16.msra.mxu0 0
  %705 = vmatprep.mubr.bf16.mxu0 0
  %706 = vmatmul.mubr.bf16.gmra.mrb[0].mxu0 %v668
  %v707 = vpop.f32.mrb[0].mxu0
  %v708 = vadd.f32 0.0, %v707
  %v709 = vpop.f32.mrb[0].mxu0
  %v710 = vpop.f32.mrb[0].mxu0
  %v711 = vpop.f32.mrb[0].mxu0
  %712 = vdwg.mxu0
  %713 = vrot.lane.b32.xlu0 %v358, 64
  %v714 = vpop.permute.xlu0 %713
  %v716 = vsel %vm567, %v614, 0
  %v719 = vsel %vm621, %v714, 0
  %721 = vmatprep.subr.bf16.mxu0 0
  %722 = vmatpush1.bf16.msra.mxu0 %v719
  %723 = vmatprep.subr.bf16.mxu0 0
  %724 = vmatpush1.bf16.msra.mxu0 0
  %725 = vmatprep.subr.bf16.mxu0 0
  %726 = vmatpush1.bf16.msra.mxu0 0
  %727 = vmatprep.subr.bf16.mxu0 0
  %728 = vmatpush1.bf16.msra.mxu0 0
  %729 = vmatprep.subr.bf16.mxu0 0
  %730 = vmatpush1.bf16.msra.mxu0 0
  %731 = vmatprep.subr.bf16.mxu0 0
  %732 = vmatpush1.bf16.msra.mxu0 0
  %733 = vmatprep.subr.bf16.mxu0 0
  %734 = vmatpush1.bf16.msra.mxu0 0
  %735 = vmatprep.subr.bf16.mxu0 0
  %736 = vmatpush1.bf16.msra.mxu0 0
  %737 = vmatprep.subr.bf16.mxu0 0
  %738 = vmatpush1.bf16.msra.mxu0 0
  %739 = vmatprep.subr.bf16.mxu0 0
  %740 = vmatpush1.bf16.msra.mxu0 0
  %741 = vmatprep.subr.bf16.mxu0 0
  %742 = vmatpush1.bf16.msra.mxu0 0
  %743 = vmatprep.subr.bf16.mxu0 0
  %744 = vmatpush1.bf16.msra.mxu0 0
  %745 = vmatprep.subr.bf16.mxu0 0
  %746 = vmatpush1.bf16.msra.mxu0 0
  %747 = vmatprep.subr.bf16.mxu0 0
  %748 = vmatpush1.bf16.msra.mxu0 0
  %749 = vmatprep.subr.bf16.mxu0 0
  %750 = vmatpush1.bf16.msra.mxu0 0
  %751 = vmatprep.subr.bf16.mxu0 0
  %752 = vmatpush1.bf16.msra.mxu0 0
  %753 = vmatprep.mubr.bf16.mxu0 0
  %754 = vmatmul.mubr.bf16.gmra.mrb[0].mxu0 %v716
  %v755 = vpop.f32.mrb[0].mxu0
  %v756 = vadd.f32 0.0, %v755
  %v757 = vpop.f32.mrb[0].mxu0
  %v758 = vpop.f32.mrb[0].mxu0
  %v759 = vpop.f32.mrb[0].mxu0
  %760 = vdwg.mxu0
  %761 = vrot.lane.b32.xlu0 %v359, 64
  %v762 = vpop.permute.xlu0 %761
  %v764 = vsel %vm567, %v615, 0
  %v767 = vsel %vm621, %v762, 0
  %769 = vmatprep.subr.bf16.mxu0 0
  %770 = vmatpush1.bf16.msra.mxu0 %v767
  %771 = vmatprep.subr.bf16.mxu0 0
  %772 = vmatpush1.bf16.msra.mxu0 0
  %773 = vmatprep.subr.bf16.mxu0 0
  %774 = vmatpush1.bf16.msra.mxu0 0
  %775 = vmatprep.subr.bf16.mxu0 0
  %776 = vmatpush1.bf16.msra.mxu0 0
  %777 = vmatprep.subr.bf16.mxu0 0
  %778 = vmatpush1.bf16.msra.mxu0 0
  %779 = vmatprep.subr.bf16.mxu0 0
  %780 = vmatpush1.bf16.msra.mxu0 0
  %781 = vmatprep.subr.bf16.mxu0 0
  %782 = vmatpush1.bf16.msra.mxu0 0
  %783 = vmatprep.subr.bf16.mxu0 0
  %784 = vmatpush1.bf16.msra.mxu0 0
  %785 = vmatprep.subr.bf16.mxu0 0
  %786 = vmatpush1.bf16.msra.mxu0 0
  %787 = vmatprep.subr.bf16.mxu0 0
  %788 = vmatpush1.bf16.msra.mxu0 0
  %789 = vmatprep.subr.bf16.mxu0 0
  %790 = vmatpush1.bf16.msra.mxu0 0
  %791 = vmatprep.subr.bf16.mxu0 0
  %792 = vmatpush1.bf16.msra.mxu0 0
  %793 = vmatprep.subr.bf16.mxu0 0
  %794 = vmatpush1.bf16.msra.mxu0 0
  %795 = vmatprep.subr.bf16.mxu0 0
  %796 = vmatpush1.bf16.msra.mxu0 0
  %797 = vmatprep.subr.bf16.mxu0 0
  %798 = vmatpush1.bf16.msra.mxu0 0
  %799 = vmatprep.subr.bf16.mxu0 0
  %800 = vmatpush1.bf16.msra.mxu0 0
  %801 = vmatprep.mubr.bf16.mxu0 0
  %802 = vmatmul.mubr.bf16.gmra.mrb[0].mxu0 %v764
  %v803 = vpop.f32.mrb[0].mxu0
  %v804 = vadd.f32 0.0, %v803
  %v805 = vpop.f32.mrb[0].mxu0
  %v806 = vpop.f32.mrb[0].mxu0
  %v807 = vpop.f32.mrb[0].mxu0
  %808 = vdwg.mxu0
  %811 = vrot.lane.b32.xlu0 %v708, 16
  %v812 = vpop.permute.xlu0 %811
  %813 = vrot.lane.b32.xlu0 %v804, 16
  %v814 = vpop.permute.xlu0 %813
  %v817 = vsel %vm373, %v660, %v812
  %v818 = vsel %vm373, %v756, %v814
  %v819 = vpack.c.bf16 %v818, %v817
  %v820 = vld [vmem:[%s5] sm:$0xf]
  %v821 = vld [vmem:[%s5 + $0x4] sm:$0xf]
  %v822 = vld [vmem:[%s5 + $0x8] sm:$0xf]
  %v823 = vld [vmem:[%s5 + $0xc] sm:$0xf]
  %v824 = vlaneseq
  %v825 = vshrl.u32 %v824, 7
  %v826 = vsub.s32 1, %v825
  %v827 = vrot.slane %v37, %v826
  %v832 = vunpack.c.l.b16 %v820
  %v833 = vunpack.c.l.b16 %v821
  %v834 = vunpack.c.l.b16 %v822
  %v835 = vunpack.c.l.b16 %v823
  %v836 = vpack.c.b16 %v833, %v832
  %v837 = vpack.c.b16 %v835, %v834
  %v841 = vsel %vm203, %v819, 0
  %843 = vmatprep.subr.bf16.mxu0 0
  %844 = vmatpush1.bf16.msra.mxu0 %v836
  %845 = vmatprep.subr.bf16.mxu0 0
  %846 = vmatpush1.bf16.msra.mxu0 %v837
  %847 = vmatprep.subr.bf16.mxu0 0
  %848 = vmatpush1.bf16.msra.mxu0 0
  %849 = vmatprep.subr.bf16.mxu0 0
  %850 = vmatpush1.bf16.msra.mxu0 0
  %851 = vmatprep.subr.bf16.mxu0 0
  %852 = vmatpush1.bf16.msra.mxu0 0
  %853 = vmatprep.subr.bf16.mxu0 0
  %854 = vmatpush1.bf16.msra.mxu0 0
  %855 = vmatprep.subr.bf16.mxu0 0
  %856 = vmatpush1.bf16.msra.mxu0 0
  %857 = vmatprep.subr.bf16.mxu0 0
  %858 = vmatpush1.bf16.msra.mxu0 0
  %859 = vmatprep.subr.bf16.mxu0 0
  %860 = vmatpush1.bf16.msra.mxu0 0
  %861 = vmatprep.subr.bf16.mxu0 0
  %862 = vmatpush1.bf16.msra.mxu0 0
  %863 = vmatprep.subr.bf16.mxu0 0
  %864 = vmatpush1.bf16.msra.mxu0 0
  %865 = vmatprep.subr.bf16.mxu0 0
  %866 = vmatpush1.bf16.msra.mxu0 0
  %867 = vmatprep.subr.bf16.mxu0 0
  %868 = vmatpush1.bf16.msra.mxu0 0
  %869 = vmatprep.subr.bf16.mxu0 0
  %870 = vmatpush1.bf16.msra.mxu0 0
  %871 = vmatprep.subr.bf16.mxu0 0
  %872 = vmatpush1.bf16.msra.mxu0 0
  %873 = vmatprep.subr.bf16.mxu0 0
  %874 = vmatpush1.bf16.msra.mxu0 0
  %875 = vmatprep.mubr.bf16.mxu0 0
  %876 = vmatmul.mubr.bf16.gmra.mrb[0].mxu0 %v841
  %v877 = vpop.f32.mrb[0].mxu0
  %v878 = vadd.f32 %v827, %v877
  %v879 = vpop.f32.mrb[0].mxu0
  %v880 = vpop.f32.mrb[0].mxu0
  %v881 = vadd.f32 %v827, %v880
  %v882 = vpop.f32.mrb[0].mxu0
  %883 = vdwg.mxu0
  %v884 = vadd.f32 %v241, %v878
  %v885 = vadd.f32 %v242, %v881
  %v886 = vsel %vm203, %v884, 0.0
  %887 = vadd.xlane.f32.xlu0 %v886
  %v888 = vpop.xlane.xlu0 %887
  %v889 = vsel %vm203, %v885, 0.0
  %890 = vadd.xlane.f32.xlu0 %v889
  %v891 = vpop.xlane.xlu0 %890
  %v892 = vmul.f32 %v888, %v210
  %v893 = vmul.f32 %v891, %v210
  %v894 = vsub.f32 %v884, %v892
  %v895 = vsub.f32 %v885, %v893
  %v896 = vmul.f32 %v894, %v894
  %v897 = vmul.f32 %v895, %v895
  %v898 = vsel %vm203, %v896, 0.0
  %899 = vadd.xlane.f32.xlu0 %v898
  %v900 = vpop.xlane.xlu0 %899
  %v901 = vsel %vm203, %v897, 0.0
  %902 = vadd.xlane.f32.xlu0 %v901
  %v903 = vpop.xlane.xlu0 %902
  %v904 = vmul.f32 %v900, %v210
  %v905 = vmul.f32 %v903, %v210
  %v906 = vadd.f32 %v904, 1e-12
  %v907 = vadd.f32 %v905, 1e-12
  %v908 = vrsqrt.pop %v906
  %v909 = vrsqrt.pop %v907
  %v910 = vmul.f32 %v894, %v908
  %v911 = vmul.f32 %v895, %v909
  %v912 = vlaneseq
  %v913 = vshrl.u32 %v912, 7
  %v914 = vsub.s32 2, %v913
  %v915 = vrot.slane %v37, %v914
  %v916 = vmul.f32 %v910, %v915
  %v917 = vmul.f32 %v911, %v915
  %v918 = vlaneseq
  %v919 = vshrl.u32 %v918, 7
  %v920 = vsub.s32 3, %v919
  %v921 = vrot.slane %v37, %v920
  %v922 = vadd.f32 %v916, %v921
  %v923 = vadd.f32 %v917, %v921
  %v924 = vpack.c.bf16 %v923, %v922
  %v925 = vld [vmem:[%s6] sm:$0xf]
  %v926 = vld [vmem:[%s6 + $0x4] sm:$0xf]
  %v927 = vld [vmem:[%s6 + $0x8] sm:$0xf]
  %v928 = vld [vmem:[%s6 + $0xc] sm:$0xf]
  %v929 = vlaneseq
  %v930 = vshrl.u32 %v929, 7
  %v931 = vsub.s32 4, %v930
  %v932 = vrot.slane %v37, %v931
  %v937 = vunpack.c.l.b16 %v925
  %v938 = vunpack.c.l.b16 %v926
  %v939 = vunpack.c.l.b16 %v927
  %v940 = vunpack.c.l.b16 %v928
  %v941 = vpack.c.b16 %v938, %v937
  %v942 = vpack.c.b16 %v940, %v939
  %v946 = vsel %vm203, %v924, 0
  %948 = vmatprep.subr.bf16.mxu0 0
  %949 = vmatpush1.bf16.msra.mxu0 %v941
  %950 = vmatprep.subr.bf16.mxu0 0
  %951 = vmatpush1.bf16.msra.mxu0 %v942
  %952 = vmatprep.subr.bf16.mxu0 0
  %953 = vmatpush1.bf16.msra.mxu0 0
  %954 = vmatprep.subr.bf16.mxu0 0
  %955 = vmatpush1.bf16.msra.mxu0 0
  %956 = vmatprep.subr.bf16.mxu0 0
  %957 = vmatpush1.bf16.msra.mxu0 0
  %958 = vmatprep.subr.bf16.mxu0 0
  %959 = vmatpush1.bf16.msra.mxu0 0
  %960 = vmatprep.subr.bf16.mxu0 0
  %961 = vmatpush1.bf16.msra.mxu0 0
  %962 = vmatprep.subr.bf16.mxu0 0
  %963 = vmatpush1.bf16.msra.mxu0 0
  %964 = vmatprep.subr.bf16.mxu0 0
  %965 = vmatpush1.bf16.msra.mxu0 0
  %966 = vmatprep.subr.bf16.mxu0 0
  %967 = vmatpush1.bf16.msra.mxu0 0
  %968 = vmatprep.subr.bf16.mxu0 0
  %969 = vmatpush1.bf16.msra.mxu0 0
  %970 = vmatprep.subr.bf16.mxu0 0
  %971 = vmatpush1.bf16.msra.mxu0 0
  %972 = vmatprep.subr.bf16.mxu0 0
  %973 = vmatpush1.bf16.msra.mxu0 0
  %974 = vmatprep.subr.bf16.mxu0 0
  %975 = vmatpush1.bf16.msra.mxu0 0
  %976 = vmatprep.subr.bf16.mxu0 0
  %977 = vmatpush1.bf16.msra.mxu0 0
  %978 = vmatprep.subr.bf16.mxu0 0
  %979 = vmatpush1.bf16.msra.mxu0 0
  %980 = vmatprep.mubr.bf16.mxu0 0
  %981 = vmatmul.mubr.bf16.gmra.mrb[0].mxu0 %v946
  %v982 = vpop.f32.mrb[0].mxu0
  %v983 = vadd.f32 %v932, %v982
  %v984 = vpop.f32.mrb[0].mxu0
  %v985 = vpop.f32.mrb[0].mxu0
  %v986 = vadd.f32 %v932, %v985
  %v987 = vpop.f32.mrb[0].mxu0
  %988 = vdwg.mxu0
  %v989 = vmul.f32 %v983, 0.5
  %v990 = vmul.f32 %v986, 0.5
  %v991 = vmul.f32 %v983, 0.044715
  %v992 = vmul.f32 %v986, 0.044715
  %v993 = vmul.f32 %v991, %v983
  %v994 = vmul.f32 %v992, %v986
  %v995 = vmul.f32 %v993, %v983
  %v996 = vmul.f32 %v994, %v986
  %v997 = vadd.f32 %v983, %v995
  %v998 = vadd.f32 %v986, %v996
  %v999 = vmul.f32 %v997, 0.7978846
  %v1000 = vmul.f32 %v998, 0.7978846
  %v1001 = vtanh.pop %v999
  %v1002 = vtanh.pop %v1000
  %v1003 = vadd.f32 %v1001, 1.0
  %v1004 = vadd.f32 %v1002, 1.0
  %v1005 = vmul.f32 %v989, %v1003
  %v1006 = vmul.f32 %v990, %v1004
  %v1007 = vpack.c.bf16 %v1006, %v1005
  %v1008 = vld [vmem:[%s7] sm:$0xf]
  %v1009 = vld [vmem:[%s7 + $0x4] sm:$0xf]
  %v1010 = vld [vmem:[%s7 + $0x8] sm:$0xf]
  %v1011 = vld [vmem:[%s7 + $0xc] sm:$0xf]
  %v1012 = vld [vmem:[%s7 + $0x10] sm:$0xf]
  %v1013 = vld [vmem:[%s7 + $0x14] sm:$0xf]
  %v1014 = vld [vmem:[%s7 + $0x18] sm:$0xf]
  %v1015 = vld [vmem:[%s7 + $0x1c] sm:$0xf]
  %v1016 = vlaneseq
  %v1017 = vshrl.u32 %v1016, 7
  %v1018 = vsub.s32 5, %v1017
  %v1019 = vrot.slane %v37, %v1018
  %v1028 = vunpack.c.l.b16 %v1008
  %v1029 = vunpack.c.l.b16 %v1009
  %v1030 = vunpack.c.l.b16 %v1010
  %v1031 = vunpack.c.l.b16 %v1011
  %v1032 = vunpack.c.l.b16 %v1012
  %v1033 = vunpack.c.l.b16 %v1013
  %v1034 = vunpack.c.l.b16 %v1014
  %v1035 = vunpack.c.l.b16 %v1015
  %v1036 = vpack.c.b16 %v1029, %v1028
  %v1037 = vpack.c.b16 %v1031, %v1030
  %v1038 = vpack.c.b16 %v1033, %v1032
  %v1039 = vpack.c.b16 %v1035, %v1034
  %vm1044 = vcmask 523264
  %v1046 = vsel %vm1044, %v1007, 0
  %1048 = vmatprep.subr.bf16.mxu0 0
  %1049 = vmatpush1.bf16.msra.mxu0 %v1036
  %1050 = vmatprep.subr.bf16.mxu0 0
  %1051 = vmatpush1.bf16.msra.mxu0 %v1037
  %1052 = vmatprep.subr.bf16.mxu0 0
  %1053 = vmatpush1.bf16.msra.mxu0 %v1038
  %1054 = vmatprep.subr.bf16.mxu0 0
  %1055 = vmatpush1.bf16.msra.mxu0 %v1039
  %1056 = vmatprep.subr.bf16.mxu0 0
  %1057 = vmatpush1.bf16.msra.mxu0 0
  %1058 = vmatprep.subr.bf16.mxu0 0
  %1059 = vmatpush1.bf16.msra.mxu0 0
  %1060 = vmatprep.subr.bf16.mxu0 0
  %1061 = vmatpush1.bf16.msra.mxu0 0
  %1062 = vmatprep.subr.bf16.mxu0 0
  %1063 = vmatpush1.bf16.msra.mxu0 0
  %1064 = vmatprep.subr.bf16.mxu0 0
  %1065 = vmatpush1.bf16.msra.mxu0 0
  %1066 = vmatprep.subr.bf16.mxu0 0
  %1067 = vmatpush1.bf16.msra.mxu0 0
  %1068 = vmatprep.subr.bf16.mxu0 0
  %1069 = vmatpush1.bf16.msra.mxu0 0
  %1070 = vmatprep.subr.bf16.mxu0 0
  %1071 = vmatpush1.bf16.msra.mxu0 0
  %1072 = vmatprep.subr.bf16.mxu0 0
  %1073 = vmatpush1.bf16.msra.mxu0 0
  %1074 = vmatprep.subr.bf16.mxu0 0
  %1075 = vmatpush1.bf16.msra.mxu0 0
  %1076 = vmatprep.subr.bf16.mxu0 0
  %1077 = vmatpush1.bf16.msra.mxu0 0
  %1078 = vmatprep.subr.bf16.mxu0 0
  %1079 = vmatpush1.bf16.msra.mxu0 0
  %1080 = vmatprep.mubr.bf16.mxu0 0
  %1081 = vmatmul.mubr.bf16.gmra.mrb[0].mxu0 %v1046
  %v1082 = vpop.f32.mrb[0].mxu0
  %v1083 = vadd.f32 %v1019, %v1082
  %v1084 = vpop.f32.mrb[0].mxu0
  %v1085 = vpop.f32.mrb[0].mxu0
  %v1086 = vadd.f32 %v1019, %v1085
  %v1087 = vpop.f32.mrb[0].mxu0
  %1088 = vdwg.mxu0
  %v1089 = vadd.f32 %v922, %v1083
  %v1090 = vadd.f32 %v923, %v1086
  %v1091 = vsel %vm203, %v1089, 0.0
  %1092 = vadd.xlane.f32.xlu0 %v1091
  %v1093 = vpop.xlane.xlu0 %1092
  %v1094 = vsel %vm203, %v1090, 0.0
  %1095 = vadd.xlane.f32.xlu0 %v1094
  %v1096 = vpop.xlane.xlu0 %1095
  %v1097 = vmul.f32 %v1093, %v210
  %v1098 = vmul.f32 %v1096, %v210
  %v1099 = vsub.f32 %v1089, %v1097
  %v1100 = vsub.f32 %v1090, %v1098
  %v1101 = vmul.f32 %v1099, %v1099
  %v1102 = vmul.f32 %v1100, %v1100
  %v1103 = vsel %vm203, %v1101, 0.0
  %1104 = vadd.xlane.f32.xlu0 %v1103
  %v1105 = vpop.xlane.xlu0 %1104
  %v1106 = vsel %vm203, %v1102, 0.0
  %1107 = vadd.xlane.f32.xlu0 %v1106
  %v1108 = vpop.xlane.xlu0 %1107
  %v1109 = vmul.f32 %v1105, %v210
  %v1110 = vmul.f32 %v1108, %v210
  %v1111 = vadd.f32 %v1109, 1e-12
  %v1112 = vadd.f32 %v1110, 1e-12
  %v1113 = vrsqrt.pop %v1111
  %v1114 = vrsqrt.pop %v1112
  %v1115 = vmul.f32 %v1099, %v1113
  %v1116 = vmul.f32 %v1100, %v1114
  %v1117 = vlaneseq
  %v1118 = vshrl.u32 %v1117, 7
  %v1119 = vsub.s32 6, %v1118
  %v1120 = vrot.slane %v37, %v1119
  %v1121 = vmul.f32 %v1115, %v1120
  %v1122 = vmul.f32 %v1116, %v1120
  %v1123 = vlaneseq
  %v1124 = vshrl.u32 %v1123, 7
  %v1125 = vsub.s32 7, %v1124
  %v1126 = vrot.slane %v37, %v1125
  %v1127 = vadd.f32 %v1121, %v1126
  %v1128 = vadd.f32 %v1122, %v1126
  %v1129 = vpack.c.bf16 %v1128, %v1127
  %s1130 = scalar_lea.vmem %s4, 16
  %v1131 = vld [vmem:[%s1130] sm:$0xf]
  %v1132 = vld [vmem:[%s1130 + $0x4] sm:$0xf]
  %v1133 = vld [vmem:[%s1130 + $0x8] sm:$0xf]
  %v1134 = vld [vmem:[%s1130 + $0xc] sm:$0xf]
  %v1135 = vlaneseq
  %v1136 = vshrl.u32 %v1135, 7
  %v1137 = vsub.s32 0, %v1136
  %v1138 = vrot.slane %v38, %v1137
  %v1143 = vunpack.c.l.b16 %v1131
  %v1144 = vunpack.c.l.b16 %v1132
  %v1145 = vunpack.c.l.b16 %v1133
  %v1146 = vunpack.c.l.b16 %v1134
  %v1147 = vpack.c.b16 %v1144, %v1143
  %v1148 = vpack.c.b16 %v1146, %v1145
  %v1152 = vsel %vm203, %v1129, 0
  %1154 = vmatprep.subr.bf16.mxu0 0
  %1155 = vmatpush1.bf16.msra.mxu0 %v1147
  %1156 = vmatprep.subr.bf16.mxu0 0
  %1157 = vmatpush1.bf16.msra.mxu0 %v1148
  %1158 = vmatprep.subr.bf16.mxu0 0
  %1159 = vmatpush1.bf16.msra.mxu0 0
  %1160 = vmatprep.subr.bf16.mxu0 0
  %1161 = vmatpush1.bf16.msra.mxu0 0
  %1162 = vmatprep.subr.bf16.mxu0 0
  %1163 = vmatpush1.bf16.msra.mxu0 0
  %1164 = vmatprep.subr.bf16.mxu0 0
  %1165 = vmatpush1.bf16.msra.mxu0 0
  %1166 = vmatprep.subr.bf16.mxu0 0
  %1167 = vmatpush1.bf16.msra.mxu0 0
  %1168 = vmatprep.subr.bf16.mxu0 0
  %1169 = vmatpush1.bf16.msra.mxu0 0
  %1170 = vmatprep.subr.bf16.mxu0 0
  %1171 = vmatpush1.bf16.msra.mxu0 0
  %1172 = vmatprep.subr.bf16.mxu0 0
  %1173 = vmatpush1.bf16.msra.mxu0 0
  %1174 = vmatprep.subr.bf16.mxu0 0
  %1175 = vmatpush1.bf16.msra.mxu0 0
  %1176 = vmatprep.subr.bf16.mxu0 0
  %1177 = vmatpush1.bf16.msra.mxu0 0
  %1178 = vmatprep.subr.bf16.mxu0 0
  %1179 = vmatpush1.bf16.msra.mxu0 0
  %1180 = vmatprep.subr.bf16.mxu0 0
  %1181 = vmatpush1.bf16.msra.mxu0 0
  %1182 = vmatprep.subr.bf16.mxu0 0
  %1183 = vmatpush1.bf16.msra.mxu0 0
  %1184 = vmatprep.subr.bf16.mxu0 0
  %1185 = vmatpush1.bf16.msra.mxu0 0
  %1186 = vmatprep.mubr.bf16.mxu0 0
  %1187 = vmatmul.mubr.bf16.gmra.mrb[0].mxu0 %v1152
  %v1188 = vpop.f32.mrb[0].mxu0
  %v1189 = vadd.f32 %v1138, %v1188
  %v1190 = vpop.f32.mrb[0].mxu0
  %v1191 = vpop.f32.mrb[0].mxu0
  %v1192 = vadd.f32 %v1138, %v1191
  %v1193 = vpop.f32.mrb[0].mxu0
  %1194 = vdwg.mxu0
  %v1195 = vmul.f32 %v1189, 0.25
  %v1196 = vmul.f32 %v1192, 0.25
  %1199 = vrot.lane.b32.xlu0 %v1195, 112
  %v1200 = vpop.permute.xlu0 %1199
  %1201 = vrot.lane.b32.xlu0 %v1196, 112
  %v1202 = vpop.permute.xlu0 %1201
  %v1205 = vpack.c.bf16 %v1195, %v1195
  %v1206 = vpack.c.bf16 %v1200, %v1200
  %v1207 = vpack.c.bf16 %v1196, %v1196
  %v1208 = vpack.c.bf16 %v1202, %v1202
  %1211 = vrot.lane.b32.xlu0 %v1189, 112
  %v1212 = vpop.permute.xlu0 %1211
  %1213 = vrot.lane.b32.xlu0 %v1192, 112
  %v1214 = vpop.permute.xlu0 %1213
  %v1217 = vpack.c.bf16 %v1189, %v1189
  %v1218 = vpack.c.bf16 %v1212, %v1212
  %v1219 = vpack.c.bf16 %v1192, %v1192
  %v1220 = vpack.c.bf16 %v1214, %v1214
  %1222 = vrot.lane.b32.xlu0 %v1217, 96
  %v1223 = vpop.permute.xlu0 %1222
  %v1225 = vsel %vm373, %v1205, 0
  %v1228 = vsel %vm373, %v1223, 0
  %1230 = vmatprep.subr.bf16.mxu0 0
  %1231 = vmatpush1.bf16.xpose.msra.mxu0 %v1228
  %1232 = vmatprep.subr.bf16.mxu0 0
  %1233 = vmatpush1.bf16.xpose.msra.mxu0 0
  %1234 = vmatprep.subr.bf16.mxu0 0
  %1235 = vmatpush1.bf16.xpose.msra.mxu0 0
  %1236 = vmatprep.subr.bf16.mxu0 0
  %1237 = vmatpush1.bf16.xpose.msra.mxu0 0
  %1238 = vmatprep.subr.bf16.mxu0 0
  %1239 = vmatpush1.bf16.xpose.msra.mxu0 0
  %1240 = vmatprep.subr.bf16.mxu0 0
  %1241 = vmatpush1.bf16.xpose.msra.mxu0 0
  %1242 = vmatprep.subr.bf16.mxu0 0
  %1243 = vmatpush1.bf16.xpose.msra.mxu0 0
  %1244 = vmatprep.subr.bf16.mxu0 0
  %1245 = vmatpush1.bf16.xpose.msra.mxu0 0
  %1246 = vmatprep.subr.bf16.mxu0 0
  %1247 = vmatpush1.bf16.xpose.msra.mxu0 0
  %1248 = vmatprep.subr.bf16.mxu0 0
  %1249 = vmatpush1.bf16.xpose.msra.mxu0 0
  %1250 = vmatprep.subr.bf16.mxu0 0
  %1251 = vmatpush1.bf16.xpose.msra.mxu0 0
  %1252 = vmatprep.subr.bf16.mxu0 0
  %1253 = vmatpush1.bf16.xpose.msra.mxu0 0
  %1254 = vmatprep.subr.bf16.mxu0 0
  %1255 = vmatpush1.bf16.xpose.msra.mxu0 0
  %1256 = vmatprep.subr.bf16.mxu0 0
  %1257 = vmatpush1.bf16.xpose.msra.mxu0 0
  %1258 = vmatprep.subr.bf16.mxu0 0
  %1259 = vmatpush1.bf16.xpose.msra.mxu0 0
  %1260 = vmatprep.subr.bf16.mxu0 0
  %1261 = vmatpush1.bf16.xpose.msra.mxu0 0
  %1262 = vmatprep.mubr.bf16.mxu0 0
  %1263 = vmatmul.mubr.bf16.gmra.mrb[0].mxu0 %v1225
  %v1264 = vpop.f32.mrb[0].mxu0
  %v1265 = vadd.f32 %v363, %v1264
  %v1266 = vpop.f32.mrb[0].mxu0
  %v1267 = vpop.f32.mrb[0].mxu0
  %v1268 = vpop.f32.mrb[0].mxu0
  %1269 = vdwg.mxu0
  %1271 = vrot.lane.b32.xlu0 %v1218, 96
  %v1272 = vpop.permute.xlu0 %1271
  %v1274 = vsel %vm373, %v1206, 0
  %v1277 = vsel %vm373, %v1272, 0
  %1279 = vmatprep.subr.bf16.mxu0 0
  %1280 = vmatpush1.bf16.xpose.msra.mxu0 %v1277
  %1281 = vmatprep.subr.bf16.mxu0 0
  %1282 = vmatpush1.bf16.xpose.msra.mxu0 0
  %1283 = vmatprep.subr.bf16.mxu0 0
  %1284 = vmatpush1.bf16.xpose.msra.mxu0 0
  %1285 = vmatprep.subr.bf16.mxu0 0
  %1286 = vmatpush1.bf16.xpose.msra.mxu0 0
  %1287 = vmatprep.subr.bf16.mxu0 0
  %1288 = vmatpush1.bf16.xpose.msra.mxu0 0
  %1289 = vmatprep.subr.bf16.mxu0 0
  %1290 = vmatpush1.bf16.xpose.msra.mxu0 0
  %1291 = vmatprep.subr.bf16.mxu0 0
  %1292 = vmatpush1.bf16.xpose.msra.mxu0 0
  %1293 = vmatprep.subr.bf16.mxu0 0
  %1294 = vmatpush1.bf16.xpose.msra.mxu0 0
  %1295 = vmatprep.subr.bf16.mxu0 0
  %1296 = vmatpush1.bf16.xpose.msra.mxu0 0
  %1297 = vmatprep.subr.bf16.mxu0 0
  %1298 = vmatpush1.bf16.xpose.msra.mxu0 0
  %1299 = vmatprep.subr.bf16.mxu0 0
  %1300 = vmatpush1.bf16.xpose.msra.mxu0 0
  %1301 = vmatprep.subr.bf16.mxu0 0
  %1302 = vmatpush1.bf16.xpose.msra.mxu0 0
  %1303 = vmatprep.subr.bf16.mxu0 0
  %1304 = vmatpush1.bf16.xpose.msra.mxu0 0
  %1305 = vmatprep.subr.bf16.mxu0 0
  %1306 = vmatpush1.bf16.xpose.msra.mxu0 0
  %1307 = vmatprep.subr.bf16.mxu0 0
  %1308 = vmatpush1.bf16.xpose.msra.mxu0 0
  %1309 = vmatprep.subr.bf16.mxu0 0
  %1310 = vmatpush1.bf16.xpose.msra.mxu0 0
  %1311 = vmatprep.mubr.bf16.mxu0 0
  %1312 = vmatmul.mubr.bf16.gmra.mrb[0].mxu0 %v1274
  %v1313 = vpop.f32.mrb[0].mxu0
  %v1314 = vadd.f32 %v363, %v1313
  %v1315 = vpop.f32.mrb[0].mxu0
  %v1316 = vpop.f32.mrb[0].mxu0
  %v1317 = vpop.f32.mrb[0].mxu0
  %1318 = vdwg.mxu0
  %1320 = vrot.lane.b32.xlu0 %v1219, 96
  %v1321 = vpop.permute.xlu0 %1320
  %v1323 = vsel %vm373, %v1207, 0
  %v1326 = vsel %vm373, %v1321, 0
  %1328 = vmatprep.subr.bf16.mxu0 0
  %1329 = vmatpush1.bf16.xpose.msra.mxu0 %v1326
  %1330 = vmatprep.subr.bf16.mxu0 0
  %1331 = vmatpush1.bf16.xpose.msra.mxu0 0
  %1332 = vmatprep.subr.bf16.mxu0 0
  %1333 = vmatpush1.bf16.xpose.msra.mxu0 0
  %1334 = vmatprep.subr.bf16.mxu0 0
  %1335 = vmatpush1.bf16.xpose.msra.mxu0 0
  %1336 = vmatprep.subr.bf16.mxu0 0
  %1337 = vmatpush1.bf16.xpose.msra.mxu0 0
  %1338 = vmatprep.subr.bf16.mxu0 0
  %1339 = vmatpush1.bf16.xpose.msra.mxu0 0
  %1340 = vmatprep.subr.bf16.mxu0 0
  %1341 = vmatpush1.bf16.xpose.msra.mxu0 0
  %1342 = vmatprep.subr.bf16.mxu0 0
  %1343 = vmatpush1.bf16.xpose.msra.mxu0 0
  %1344 = vmatprep.subr.bf16.mxu0 0
  %1345 = vmatpush1.bf16.xpose.msra.mxu0 0
  %1346 = vmatprep.subr.bf16.mxu0 0
  %1347 = vmatpush1.bf16.xpose.msra.mxu0 0
  %1348 = vmatprep.subr.bf16.mxu0 0
  %1349 = vmatpush1.bf16.xpose.msra.mxu0 0
  %1350 = vmatprep.subr.bf16.mxu0 0
  %1351 = vmatpush1.bf16.xpose.msra.mxu0 0
  %1352 = vmatprep.subr.bf16.mxu0 0
  %1353 = vmatpush1.bf16.xpose.msra.mxu0 0
  %1354 = vmatprep.subr.bf16.mxu0 0
  %1355 = vmatpush1.bf16.xpose.msra.mxu0 0
  %1356 = vmatprep.subr.bf16.mxu0 0
  %1357 = vmatpush1.bf16.xpose.msra.mxu0 0
  %1358 = vmatprep.subr.bf16.mxu0 0
  %1359 = vmatpush1.bf16.xpose.msra.mxu0 0
  %1360 = vmatprep.mubr.bf16.mxu0 0
  %1361 = vmatmul.mubr.bf16.gmra.mrb[0].mxu0 %v1323
  %v1362 = vpop.f32.mrb[0].mxu0
  %v1363 = vadd.f32 %v367, %v1362
  %v1364 = vpop.f32.mrb[0].mxu0
  %v1365 = vpop.f32.mrb[0].mxu0
  %v1366 = vpop.f32.mrb[0].mxu0
  %1367 = vdwg.mxu0
  %1369 = vrot.lane.b32.xlu0 %v1220, 96
  %v1370 = vpop.permute.xlu0 %1369
  %v1372 = vsel %vm373, %v1208, 0
  %v1375 = vsel %vm373, %v1370, 0
  %1377 = vmatprep.subr.bf16.mxu0 0
  %1378 = vmatpush1.bf16.xpose.msra.mxu0 %v1375
  %1379 = vmatprep.subr.bf16.mxu0 0
  %1380 = vmatpush1.bf16.xpose.msra.mxu0 0
  %1381 = vmatprep.subr.bf16.mxu0 0
  %1382 = vmatpush1.bf16.xpose.msra.mxu0 0
  %1383 = vmatprep.subr.bf16.mxu0 0
  %1384 = vmatpush1.bf16.xpose.msra.mxu0 0
  %1385 = vmatprep.subr.bf16.mxu0 0
  %1386 = vmatpush1.bf16.xpose.msra.mxu0 0
  %1387 = vmatprep.subr.bf16.mxu0 0
  %1388 = vmatpush1.bf16.xpose.msra.mxu0 0
  %1389 = vmatprep.subr.bf16.mxu0 0
  %1390 = vmatpush1.bf16.xpose.msra.mxu0 0
  %1391 = vmatprep.subr.bf16.mxu0 0
  %1392 = vmatpush1.bf16.xpose.msra.mxu0 0
  %1393 = vmatprep.subr.bf16.mxu0 0
  %1394 = vmatpush1.bf16.xpose.msra.mxu0 0
  %1395 = vmatprep.subr.bf16.mxu0 0
  %1396 = vmatpush1.bf16.xpose.msra.mxu0 0
  %1397 = vmatprep.subr.bf16.mxu0 0
  %1398 = vmatpush1.bf16.xpose.msra.mxu0 0
  %1399 = vmatprep.subr.bf16.mxu0 0
  %1400 = vmatpush1.bf16.xpose.msra.mxu0 0
  %1401 = vmatprep.subr.bf16.mxu0 0
  %1402 = vmatpush1.bf16.xpose.msra.mxu0 0
  %1403 = vmatprep.subr.bf16.mxu0 0
  %1404 = vmatpush1.bf16.xpose.msra.mxu0 0
  %1405 = vmatprep.subr.bf16.mxu0 0
  %1406 = vmatpush1.bf16.xpose.msra.mxu0 0
  %1407 = vmatprep.subr.bf16.mxu0 0
  %1408 = vmatpush1.bf16.xpose.msra.mxu0 0
  %1409 = vmatprep.mubr.bf16.mxu0 0
  %1410 = vmatmul.mubr.bf16.gmra.mrb[0].mxu0 %v1372
  %v1411 = vpop.f32.mrb[0].mxu0
  %v1412 = vadd.f32 %v367, %v1411
  %v1413 = vpop.f32.mrb[0].mxu0
  %v1414 = vpop.f32.mrb[0].mxu0
  %v1415 = vpop.f32.mrb[0].mxu0
  %1416 = vdwg.mxu0
  %v1417 = vsel %vm567, %v1265, -inf
  %1418 = vmax.xlane.f32.xlu0 %v1417
  %v1419 = vpop.xlane.xlu0 %1418
  %v1420 = vsel %vm567, %v1314, -inf
  %1421 = vmax.xlane.f32.xlu0 %v1420
  %v1422 = vpop.xlane.xlu0 %1421
  %v1423 = vsel %vm567, %v1363, -inf
  %1424 = vmax.xlane.f32.xlu0 %v1423
  %v1425 = vpop.xlane.xlu0 %1424
  %v1426 = vsel %vm567, %v1412, -inf
  %1427 = vmax.xlane.f32.xlu0 %v1426
  %v1428 = vpop.xlane.xlu0 %1427
  %v1429 = vsub.f32 %v1265, %v1419
  %v1430 = vsub.f32 %v1314, %v1422
  %v1431 = vsub.f32 %v1363, %v1425
  %v1432 = vsub.f32 %v1412, %v1428
  %v1433 = vmul.f32 %v1429, 1.442695
  %v1434 = vpow.pop %v1433
  %v1435 = vmul.f32 %v1430, 1.442695
  %v1436 = vpow.pop %v1435
  %v1437 = vmul.f32 %v1431, 1.442695
  %v1438 = vpow.pop %v1437
  %v1439 = vmul.f32 %v1432, 1.442695
  %v1440 = vpow.pop %v1439
  %v1441 = vsel %vm567, %v1434, 0.0
  %1442 = vadd.xlane.f32.xlu0 %v1441
  %v1443 = vpop.xlane.xlu0 %1442
  %v1444 = vsel %vm567, %v1436, 0.0
  %1445 = vadd.xlane.f32.xlu0 %v1444
  %v1446 = vpop.xlane.xlu0 %1445
  %v1447 = vsel %vm567, %v1438, 0.0
  %1448 = vadd.xlane.f32.xlu0 %v1447
  %v1449 = vpop.xlane.xlu0 %1448
  %v1450 = vsel %vm567, %v1440, 0.0
  %1451 = vadd.xlane.f32.xlu0 %v1450
  %v1452 = vpop.xlane.xlu0 %1451
  %v1453 = vrcp.pop %v1443
  %v1454 = vrcp.pop %v1446
  %v1455 = vrcp.pop %v1449
  %v1456 = vrcp.pop %v1452
  %v1457 = vmul.f32 %v1434, %v1453
  %v1458 = vmul.f32 %v1436, %v1454
  %v1459 = vmul.f32 %v1438, %v1455
  %v1460 = vmul.f32 %v1440, %v1456
  %v1461 = vpack.c.bf16 %v1457, %v1457
  %v1462 = vpack.c.bf16 %v1458, %v1458
  %v1463 = vpack.c.bf16 %v1459, %v1459
  %v1464 = vpack.c.bf16 %v1460, %v1460
  %1465 = vrot.lane.b32.xlu0 %v1217, 64
  %v1466 = vpop.permute.xlu0 %1465
  %v1468 = vsel %vm567, %v1461, 0
  %v1471 = vsel %vm621, %v1466, 0
  %1473 = vmatprep.subr.bf16.mxu0 0
  %1474 = vmatpush1.bf16.msra.mxu0 %v1471
  %1475 = vmatprep.subr.bf16.mxu0 0
  %1476 = vmatpush1.bf16.msra.mxu0 0
  %1477 = vmatprep.subr.bf16.mxu0 0
  %1478 = vmatpush1.bf16.msra.mxu0 0
  %1479 = vmatprep.subr.bf16.mxu0 0
  %1480 = vmatpush1.bf16.msra.mxu0 0
  %1481 = vmatprep.subr.bf16.mxu0 0
  %1482 = vmatpush1.bf16.msra.mxu0 0
  %1483 = vmatprep.subr.bf16.mxu0 0
  %1484 = vmatpush1.bf16.msra.mxu0 0
  %1485 = vmatprep.subr.bf16.mxu0 0
  %1486 = vmatpush1.bf16.msra.mxu0 0
  %1487 = vmatprep.subr.bf16.mxu0 0
  %1488 = vmatpush1.bf16.msra.mxu0 0
  %1489 = vmatprep.subr.bf16.mxu0 0
  %1490 = vmatpush1.bf16.msra.mxu0 0
  %1491 = vmatprep.subr.bf16.mxu0 0
  %1492 = vmatpush1.bf16.msra.mxu0 0
  %1493 = vmatprep.subr.bf16.mxu0 0
  %1494 = vmatpush1.bf16.msra.mxu0 0
  %1495 = vmatprep.subr.bf16.mxu0 0
  %1496 = vmatpush1.bf16.msra.mxu0 0
  %1497 = vmatprep.subr.bf16.mxu0 0
  %1498 = vmatpush1.bf16.msra.mxu0 0
  %1499 = vmatprep.subr.bf16.mxu0 0
  %1500 = vmatpush1.bf16.msra.mxu0 0
  %1501 = vmatprep.subr.bf16.mxu0 0
  %1502 = vmatpush1.bf16.msra.mxu0 0
  %1503 = vmatprep.subr.bf16.mxu0 0
  %1504 = vmatpush1.bf16.msra.mxu0 0
  %1505 = vmatprep.mubr.bf16.mxu0 0
  %1506 = vmatmul.mubr.bf16.gmra.mrb[0].mxu0 %v1468
  %v1507 = vpop.f32.mrb[0].mxu0
  %v1508 = vadd.f32 0.0, %v1507
  %v1509 = vpop.f32.mrb[0].mxu0
  %v1510 = vpop.f32.mrb[0].mxu0
  %v1511 = vpop.f32.mrb[0].mxu0
  %1512 = vdwg.mxu0
  %1513 = vrot.lane.b32.xlu0 %v1218, 64
  %v1514 = vpop.permute.xlu0 %1513
  %v1516 = vsel %vm567, %v1462, 0
  %v1519 = vsel %vm621, %v1514, 0
  %1521 = vmatprep.subr.bf16.mxu0 0
  %1522 = vmatpush1.bf16.msra.mxu0 %v1519
  %1523 = vmatprep.subr.bf16.mxu0 0
  %1524 = vmatpush1.bf16.msra.mxu0 0
  %1525 = vmatprep.subr.bf16.mxu0 0
  %1526 = vmatpush1.bf16.msra.mxu0 0
  %1527 = vmatprep.subr.bf16.mxu0 0
  %1528 = vmatpush1.bf16.msra.mxu0 0
  %1529 = vmatprep.subr.bf16.mxu0 0
  %1530 = vmatpush1.bf16.msra.mxu0 0
  %1531 = vmatprep.subr.bf16.mxu0 0
  %1532 = vmatpush1.bf16.msra.mxu0 0
  %1533 = vmatprep.subr.bf16.mxu0 0
  %1534 = vmatpush1.bf16.msra.mxu0 0
  %1535 = vmatprep.subr.bf16.mxu0 0
  %1536 = vmatpush1.bf16.msra.mxu0 0
  %1537 = vmatprep.subr.bf16.mxu0 0
  %1538 = vmatpush1.bf16.msra.mxu0 0
  %1539 = vmatprep.subr.bf16.mxu0 0
  %1540 = vmatpush1.bf16.msra.mxu0 0
  %1541 = vmatprep.subr.bf16.mxu0 0
  %1542 = vmatpush1.bf16.msra.mxu0 0
  %1543 = vmatprep.subr.bf16.mxu0 0
  %1544 = vmatpush1.bf16.msra.mxu0 0
  %1545 = vmatprep.subr.bf16.mxu0 0
  %1546 = vmatpush1.bf16.msra.mxu0 0
  %1547 = vmatprep.subr.bf16.mxu0 0
  %1548 = vmatpush1.bf16.msra.mxu0 0
  %1549 = vmatprep.subr.bf16.mxu0 0
  %1550 = vmatpush1.bf16.msra.mxu0 0
  %1551 = vmatprep.subr.bf16.mxu0 0
  %1552 = vmatpush1.bf16.msra.mxu0 0
  %1553 = vmatprep.mubr.bf16.mxu0 0
  %1554 = vmatmul.mubr.bf16.gmra.mrb[0].mxu0 %v1516
  %v1555 = vpop.f32.mrb[0].mxu0
  %v1556 = vadd.f32 0.0, %v1555
  %v1557 = vpop.f32.mrb[0].mxu0
  %v1558 = vpop.f32.mrb[0].mxu0
  %v1559 = vpop.f32.mrb[0].mxu0
  %1560 = vdwg.mxu0
  %1561 = vrot.lane.b32.xlu0 %v1219, 64
  %v1562 = vpop.permute.xlu0 %1561
  %v1564 = vsel %vm567, %v1463, 0
  %v1567 = vsel %vm621, %v1562, 0
  %1569 = vmatprep.subr.bf16.mxu0 0
  %1570 = vmatpush1.bf16.msra.mxu0 %v1567
  %1571 = vmatprep.subr.bf16.mxu0 0
  %1572 = vmatpush1.bf16.msra.mxu0 0
  %1573 = vmatprep.subr.bf16.mxu0 0
  %1574 = vmatpush1.bf16.msra.mxu0 0
  %1575 = vmatprep.subr.bf16.mxu0 0
  %1576 = vmatpush1.bf16.msra.mxu0 0
  %1577 = vmatprep.subr.bf16.mxu0 0
  %1578 = vmatpush1.bf16.msra.mxu0 0
  %1579 = vmatprep.subr.bf16.mxu0 0
  %1580 = vmatpush1.bf16.msra.mxu0 0
  %1581 = vmatprep.subr.bf16.mxu0 0
  %1582 = vmatpush1.bf16.msra.mxu0 0
  %1583 = vmatprep.subr.bf16.mxu0 0
  %1584 = vmatpush1.bf16.msra.mxu0 0
  %1585 = vmatprep.subr.bf16.mxu0 0
  %1586 = vmatpush1.bf16.msra.mxu0 0
  %1587 = vmatprep.subr.bf16.mxu0 0
  %1588 = vmatpush1.bf16.msra.mxu0 0
  %1589 = vmatprep.subr.bf16.mxu0 0
  %1590 = vmatpush1.bf16.msra.mxu0 0
  %1591 = vmatprep.subr.bf16.mxu0 0
  %1592 = vmatpush1.bf16.msra.mxu0 0
  %1593 = vmatprep.subr.bf16.mxu0 0
  %1594 = vmatpush1.bf16.msra.mxu0 0
  %1595 = vmatprep.subr.bf16.mxu0 0
  %1596 = vmatpush1.bf16.msra.mxu0 0
  %1597 = vmatprep.subr.bf16.mxu0 0
  %1598 = vmatpush1.bf16.msra.mxu0 0
  %1599 = vmatprep.subr.bf16.mxu0 0
  %1600 = vmatpush1.bf16.msra.mxu0 0
  %1601 = vmatprep.mubr.bf16.mxu0 0
  %1602 = vmatmul.mubr.bf16.gmra.mrb[0].mxu0 %v1564
  %v1603 = vpop.f32.mrb[0].mxu0
  %v1604 = vadd.f32 0.0, %v1603
  %v1605 = vpop.f32.mrb[0].mxu0
  %v1606 = vpop.f32.mrb[0].mxu0
  %v1607 = vpop.f32.mrb[0].mxu0
  %1608 = vdwg.mxu0
  %1609 = vrot.lane.b32.xlu0 %v1220, 64
  %v1610 = vpop.permute.xlu0 %1609
  %v1612 = vsel %vm567, %v1464, 0
  %v1615 = vsel %vm621, %v1610, 0
  %1617 = vmatprep.subr.bf16.mxu0 0
  %1618 = vmatpush1.bf16.msra.mxu0 %v1615
  %1619 = vmatprep.subr.bf16.mxu0 0
  %1620 = vmatpush1.bf16.msra.mxu0 0
  %1621 = vmatprep.subr.bf16.mxu0 0
  %1622 = vmatpush1.bf16.msra.mxu0 0
  %1623 = vmatprep.subr.bf16.mxu0 0
  %1624 = vmatpush1.bf16.msra.mxu0 0
  %1625 = vmatprep.subr.bf16.mxu0 0
  %1626 = vmatpush1.bf16.msra.mxu0 0
  %1627 = vmatprep.subr.bf16.mxu0 0
  %1628 = vmatpush1.bf16.msra.mxu0 0
  %1629 = vmatprep.subr.bf16.mxu0 0
  %1630 = vmatpush1.bf16.msra.mxu0 0
  %1631 = vmatprep.subr.bf16.mxu0 0
  %1632 = vmatpush1.bf16.msra.mxu0 0
  %1633 = vmatprep.subr.bf16.mxu0 0
  %1634 = vmatpush1.bf16.msra.mxu0 0
  %1635 = vmatprep.subr.bf16.mxu0 0
  %1636 = vmatpush1.bf16.msra.mxu0 0
  %1637 = vmatprep.subr.bf16.mxu0 0
  %1638 = vmatpush1.bf16.msra.mxu0 0
  %1639 = vmatprep.subr.bf16.mxu0 0
  %1640 = vmatpush1.bf16.msra.mxu0 0
  %1641 = vmatprep.subr.bf16.mxu0 0
  %1642 = vmatpush1.bf16.msra.mxu0 0
  %1643 = vmatprep.subr.bf16.mxu0 0
  %1644 = vmatpush1.bf16.msra.mxu0 0
  %1645 = vmatprep.subr.bf16.mxu0 0
  %1646 = vmatpush1.bf16.msra.mxu0 0
  %1647 = vmatprep.subr.bf16.mxu0 0
  %1648 = vmatpush1.bf16.msra.mxu0 0
  %1649 = vmatprep.mubr.bf16.mxu0 0
  %1650 = vmatmul.mubr.bf16.gmra.mrb[0].mxu0 %v1612
  %v1651 = vpop.f32.mrb[0].mxu0
  %v1652 = vadd.f32 0.0, %v1651
  %v1653 = vpop.f32.mrb[0].mxu0
  %v1654 = vpop.f32.mrb[0].mxu0
  %v1655 = vpop.f32.mrb[0].mxu0
  %1656 = vdwg.mxu0
  %1659 = vrot.lane.b32.xlu0 %v1556, 16
  %v1660 = vpop.permute.xlu0 %1659
  %1661 = vrot.lane.b32.xlu0 %v1652, 16
  %v1662 = vpop.permute.xlu0 %1661
  %v1665 = vsel %vm373, %v1508, %v1660
  %v1666 = vsel %vm373, %v1604, %v1662
  %v1667 = vpack.c.bf16 %v1666, %v1665
  %s1668 = scalar_lea.vmem %s5, 16
  %v1669 = vld [vmem:[%s1668] sm:$0xf]
  %v1670 = vld [vmem:[%s1668 + $0x4] sm:$0xf]
  %v1671 = vld [vmem:[%s1668 + $0x8] sm:$0xf]
  %v1672 = vld [vmem:[%s1668 + $0xc] sm:$0xf]
  %v1673 = vlaneseq
  %v1674 = vshrl.u32 %v1673, 7
  %v1675 = vsub.s32 1, %v1674
  %v1676 = vrot.slane %v38, %v1675
  %v1681 = vunpack.c.l.b16 %v1669
  %v1682 = vunpack.c.l.b16 %v1670
  %v1683 = vunpack.c.l.b16 %v1671
  %v1684 = vunpack.c.l.b16 %v1672
  %v1685 = vpack.c.b16 %v1682, %v1681
  %v1686 = vpack.c.b16 %v1684, %v1683
  %v1690 = vsel %vm203, %v1667, 0
  %1692 = vmatprep.subr.bf16.mxu0 0
  %1693 = vmatpush1.bf16.msra.mxu0 %v1685
  %1694 = vmatprep.subr.bf16.mxu0 0
  %1695 = vmatpush1.bf16.msra.mxu0 %v1686
  %1696 = vmatprep.subr.bf16.mxu0 0
  %1697 = vmatpush1.bf16.msra.mxu0 0
  %1698 = vmatprep.subr.bf16.mxu0 0
  %1699 = vmatpush1.bf16.msra.mxu0 0
  %1700 = vmatprep.subr.bf16.mxu0 0
  %1701 = vmatpush1.bf16.msra.mxu0 0
  %1702 = vmatprep.subr.bf16.mxu0 0
  %1703 = vmatpush1.bf16.msra.mxu0 0
  %1704 = vmatprep.subr.bf16.mxu0 0
  %1705 = vmatpush1.bf16.msra.mxu0 0
  %1706 = vmatprep.subr.bf16.mxu0 0
  %1707 = vmatpush1.bf16.msra.mxu0 0
  %1708 = vmatprep.subr.bf16.mxu0 0
  %1709 = vmatpush1.bf16.msra.mxu0 0
  %1710 = vmatprep.subr.bf16.mxu0 0
  %1711 = vmatpush1.bf16.msra.mxu0 0
  %1712 = vmatprep.subr.bf16.mxu0 0
  %1713 = vmatpush1.bf16.msra.mxu0 0
  %1714 = vmatprep.subr.bf16.mxu0 0
  %1715 = vmatpush1.bf16.msra.mxu0 0
  %1716 = vmatprep.subr.bf16.mxu0 0
  %1717 = vmatpush1.bf16.msra.mxu0 0
  %1718 = vmatprep.subr.bf16.mxu0 0
  %1719 = vmatpush1.bf16.msra.mxu0 0
  %1720 = vmatprep.subr.bf16.mxu0 0
  %1721 = vmatpush1.bf16.msra.mxu0 0
  %1722 = vmatprep.subr.bf16.mxu0 0
  %1723 = vmatpush1.bf16.msra.mxu0 0
  %1724 = vmatprep.mubr.bf16.mxu0 0
  %1725 = vmatmul.mubr.bf16.gmra.mrb[0].mxu0 %v1690
  %v1726 = vpop.f32.mrb[0].mxu0
  %v1727 = vadd.f32 %v1676, %v1726
  %v1728 = vpop.f32.mrb[0].mxu0
  %v1729 = vpop.f32.mrb[0].mxu0
  %v1730 = vadd.f32 %v1676, %v1729
  %v1731 = vpop.f32.mrb[0].mxu0
  %1732 = vdwg.mxu0
  %v1733 = vadd.f32 %v1127, %v1727
  %v1734 = vadd.f32 %v1128, %v1730
  %v1735 = vsel %vm203, %v1733, 0.0
  %1736 = vadd.xlane.f32.xlu0 %v1735
  %v1737 = vpop.xlane.xlu0 %1736
  %v1738 = vsel %vm203, %v1734, 0.0
  %1739 = vadd.xlane.f32.xlu0 %v1738
  %v1740 = vpop.xlane.xlu0 %1739
  %v1741 = vmul.f32 %v1737, %v210
  %v1742 = vmul.f32 %v1740, %v210
  %v1743 = vsub.f32 %v1733, %v1741
  %v1744 = vsub.f32 %v1734, %v1742
  %v1745 = vmul.f32 %v1743, %v1743
  %v1746 = vmul.f32 %v1744, %v1744
  %v1747 = vsel %vm203, %v1745, 0.0
  %1748 = vadd.xlane.f32.xlu0 %v1747
  %v1749 = vpop.xlane.xlu0 %1748
  %v1750 = vsel %vm203, %v1746, 0.0
  %1751 = vadd.xlane.f32.xlu0 %v1750
  %v1752 = vpop.xlane.xlu0 %1751
  %v1753 = vmul.f32 %v1749, %v210
  %v1754 = vmul.f32 %v1752, %v210
  %v1755 = vadd.f32 %v1753, 1e-12
  %v1756 = vadd.f32 %v1754, 1e-12
  %v1757 = vrsqrt.pop %v1755
  %v1758 = vrsqrt.pop %v1756
  %v1759 = vmul.f32 %v1743, %v1757
  %v1760 = vmul.f32 %v1744, %v1758
  %v1761 = vlaneseq
  %v1762 = vshrl.u32 %v1761, 7
  %v1763 = vsub.s32 2, %v1762
  %v1764 = vrot.slane %v38, %v1763
  %v1765 = vmul.f32 %v1759, %v1764
  %v1766 = vmul.f32 %v1760, %v1764
  %v1767 = vlaneseq
  %v1768 = vshrl.u32 %v1767, 7
  %v1769 = vsub.s32 3, %v1768
  %v1770 = vrot.slane %v38, %v1769
  %v1771 = vadd.f32 %v1765, %v1770
  %v1772 = vadd.f32 %v1766, %v1770
  %v1773 = vpack.c.bf16 %v1772, %v1771
  %s1774 = scalar_lea.vmem %s6, 16
  %v1775 = vld [vmem:[%s1774] sm:$0xf]
  %v1776 = vld [vmem:[%s1774 + $0x4] sm:$0xf]
  %v1777 = vld [vmem:[%s1774 + $0x8] sm:$0xf]
  %v1778 = vld [vmem:[%s1774 + $0xc] sm:$0xf]
  %v1779 = vlaneseq
  %v1780 = vshrl.u32 %v1779, 7
  %v1781 = vsub.s32 4, %v1780
  %v1782 = vrot.slane %v38, %v1781
  %v1787 = vunpack.c.l.b16 %v1775
  %v1788 = vunpack.c.l.b16 %v1776
  %v1789 = vunpack.c.l.b16 %v1777
  %v1790 = vunpack.c.l.b16 %v1778
  %v1791 = vpack.c.b16 %v1788, %v1787
  %v1792 = vpack.c.b16 %v1790, %v1789
  %v1796 = vsel %vm203, %v1773, 0
  %1798 = vmatprep.subr.bf16.mxu0 0
  %1799 = vmatpush1.bf16.msra.mxu0 %v1791
  %1800 = vmatprep.subr.bf16.mxu0 0
  %1801 = vmatpush1.bf16.msra.mxu0 %v1792
  %1802 = vmatprep.subr.bf16.mxu0 0
  %1803 = vmatpush1.bf16.msra.mxu0 0
  %1804 = vmatprep.subr.bf16.mxu0 0
  %1805 = vmatpush1.bf16.msra.mxu0 0
  %1806 = vmatprep.subr.bf16.mxu0 0
  %1807 = vmatpush1.bf16.msra.mxu0 0
  %1808 = vmatprep.subr.bf16.mxu0 0
  %1809 = vmatpush1.bf16.msra.mxu0 0
  %1810 = vmatprep.subr.bf16.mxu0 0
  %1811 = vmatpush1.bf16.msra.mxu0 0
  %1812 = vmatprep.subr.bf16.mxu0 0
  %1813 = vmatpush1.bf16.msra.mxu0 0
  %1814 = vmatprep.subr.bf16.mxu0 0
  %1815 = vmatpush1.bf16.msra.mxu0 0
  %1816 = vmatprep.subr.bf16.mxu0 0
  %1817 = vmatpush1.bf16.msra.mxu0 0
  %1818 = vmatprep.subr.bf16.mxu0 0
  %1819 = vmatpush1.bf16.msra.mxu0 0
  %1820 = vmatprep.subr.bf16.mxu0 0
  %1821 = vmatpush1.bf16.msra.mxu0 0
  %1822 = vmatprep.subr.bf16.mxu0 0
  %1823 = vmatpush1.bf16.msra.mxu0 0
  %1824 = vmatprep.subr.bf16.mxu0 0
  %1825 = vmatpush1.bf16.msra.mxu0 0
  %1826 = vmatprep.subr.bf16.mxu0 0
  %1827 = vmatpush1.bf16.msra.mxu0 0
  %1828 = vmatprep.subr.bf16.mxu0 0
  %1829 = vmatpush1.bf16.msra.mxu0 0
  %1830 = vmatprep.mubr.bf16.mxu0 0
  %1831 = vmatmul.mubr.bf16.gmra.mrb[0].mxu0 %v1796
  %v1832 = vpop.f32.mrb[0].mxu0
  %v1833 = vadd.f32 %v1782, %v1832
  %v1834 = vpop.f32.mrb[0].mxu0
  %v1835 = vpop.f32.mrb[0].mxu0
  %v1836 = vadd.f32 %v1782, %v1835
  %v1837 = vpop.f32.mrb[0].mxu0
  %1838 = vdwg.mxu0
  %v1839 = vmul.f32 %v1833, 0.5
  %v1840 = vmul.f32 %v1836, 0.5
  %v1841 = vmul.f32 %v1833, 0.044715
  %v1842 = vmul.f32 %v1836, 0.044715
  %v1843 = vmul.f32 %v1841, %v1833
  %v1844 = vmul.f32 %v1842, %v1836
  %v1845 = vmul.f32 %v1843, %v1833
  %v1846 = vmul.f32 %v1844, %v1836
  %v1847 = vadd.f32 %v1833, %v1845
  %v1848 = vadd.f32 %v1836, %v1846
  %v1849 = vmul.f32 %v1847, 0.7978846
  %v1850 = vmul.f32 %v1848, 0.7978846
  %v1851 = vtanh.pop %v1849
  %v1852 = vtanh.pop %v1850
  %v1853 = vadd.f32 %v1851, 1.0
  %v1854 = vadd.f32 %v1852, 1.0
  %v1855 = vmul.f32 %v1839, %v1853
  %v1856 = vmul.f32 %v1840, %v1854
  %v1857 = vpack.c.bf16 %v1856, %v1855
  %s1858 = scalar_lea.vmem %s7, 32
  %v1859 = vld [vmem:[%s1858] sm:$0xf]
  %v1860 = vld [vmem:[%s1858 + $0x4] sm:$0xf]
  %v1861 = vld [vmem:[%s1858 + $0x8] sm:$0xf]
  %v1862 = vld [vmem:[%s1858 + $0xc] sm:$0xf]
  %v1863 = vld [vmem:[%s1858 + $0x10] sm:$0xf]
  %v1864 = vld [vmem:[%s1858 + $0x14] sm:$0xf]
  %v1865 = vld [vmem:[%s1858 + $0x18] sm:$0xf]
  %v1866 = vld [vmem:[%s1858 + $0x1c] sm:$0xf]
  %v1867 = vlaneseq
  %v1868 = vshrl.u32 %v1867, 7
  %v1869 = vsub.s32 5, %v1868
  %v1870 = vrot.slane %v38, %v1869
  %v1879 = vunpack.c.l.b16 %v1859
  %v1880 = vunpack.c.l.b16 %v1860
  %v1881 = vunpack.c.l.b16 %v1861
  %v1882 = vunpack.c.l.b16 %v1862
  %v1883 = vunpack.c.l.b16 %v1863
  %v1884 = vunpack.c.l.b16 %v1864
  %v1885 = vunpack.c.l.b16 %v1865
  %v1886 = vunpack.c.l.b16 %v1866
  %v1887 = vpack.c.b16 %v1880, %v1879
  %v1888 = vpack.c.b16 %v1882, %v1881
  %v1889 = vpack.c.b16 %v1884, %v1883
  %v1890 = vpack.c.b16 %v1886, %v1885
  %v1896 = vsel %vm1044, %v1857, 0
  %1898 = vmatprep.subr.bf16.mxu0 0
  %1899 = vmatpush1.bf16.msra.mxu0 %v1887
  %1900 = vmatprep.subr.bf16.mxu0 0
  %1901 = vmatpush1.bf16.msra.mxu0 %v1888
  %1902 = vmatprep.subr.bf16.mxu0 0
  %1903 = vmatpush1.bf16.msra.mxu0 %v1889
  %1904 = vmatprep.subr.bf16.mxu0 0
  %1905 = vmatpush1.bf16.msra.mxu0 %v1890
  %1906 = vmatprep.subr.bf16.mxu0 0
  %1907 = vmatpush1.bf16.msra.mxu0 0
  %1908 = vmatprep.subr.bf16.mxu0 0
  %1909 = vmatpush1.bf16.msra.mxu0 0
  %1910 = vmatprep.subr.bf16.mxu0 0
  %1911 = vmatpush1.bf16.msra.mxu0 0
  %1912 = vmatprep.subr.bf16.mxu0 0
  %1913 = vmatpush1.bf16.msra.mxu0 0
  %1914 = vmatprep.subr.bf16.mxu0 0
  %1915 = vmatpush1.bf16.msra.mxu0 0
  %1916 = vmatprep.subr.bf16.mxu0 0
  %1917 = vmatpush1.bf16.msra.mxu0 0
  %1918 = vmatprep.subr.bf16.mxu0 0
  %1919 = vmatpush1.bf16.msra.mxu0 0
  %1920 = vmatprep.subr.bf16.mxu0 0
  %1921 = vmatpush1.bf16.msra.mxu0 0
  %1922 = vmatprep.subr.bf16.mxu0 0
  %1923 = vmatpush1.bf16.msra.mxu0 0
  %1924 = vmatprep.subr.bf16.mxu0 0
  %1925 = vmatpush1.bf16.msra.mxu0 0
  %1926 = vmatprep.subr.bf16.mxu0 0
  %1927 = vmatpush1.bf16.msra.mxu0 0
  %1928 = vmatprep.subr.bf16.mxu0 0
  %1929 = vmatpush1.bf16.msra.mxu0 0
  %1930 = vmatprep.mubr.bf16.mxu0 0
  %1931 = vmatmul.mubr.bf16.gmra.mrb[0].mxu0 %v1896
  %v1932 = vpop.f32.mrb[0].mxu0
  %v1933 = vadd.f32 %v1870, %v1932
  %v1934 = vpop.f32.mrb[0].mxu0
  %v1935 = vpop.f32.mrb[0].mxu0
  %v1936 = vadd.f32 %v1870, %v1935
  %v1937 = vpop.f32.mrb[0].mxu0
  %1938 = vdwg.mxu0
  %v1939 = vadd.f32 %v1771, %v1933
  %v1940 = vadd.f32 %v1772, %v1936
  %v1941 = vsel %vm203, %v1939, 0.0
  %1942 = vadd.xlane.f32.xlu0 %v1941
  %v1943 = vpop.xlane.xlu0 %1942
  %v1944 = vsel %vm203, %v1940, 0.0
  %1945 = vadd.xlane.f32.xlu0 %v1944
  %v1946 = vpop.xlane.xlu0 %1945
  %v1947 = vmul.f32 %v1943, %v210
  %v1948 = vmul.f32 %v1946, %v210
  %v1949 = vsub.f32 %v1939, %v1947
  %v1950 = vsub.f32 %v1940, %v1948
  %v1951 = vmul.f32 %v1949, %v1949
  %v1952 = vmul.f32 %v1950, %v1950
  %v1953 = vsel %vm203, %v1951, 0.0
  %1954 = vadd.xlane.f32.xlu0 %v1953
  %v1955 = vpop.xlane.xlu0 %1954
  %v1956 = vsel %vm203, %v1952, 0.0
  %1957 = vadd.xlane.f32.xlu0 %v1956
  %v1958 = vpop.xlane.xlu0 %1957
  %v1959 = vmul.f32 %v1955, %v210
  %v1960 = vmul.f32 %v1958, %v210
  %v1961 = vadd.f32 %v1959, 1e-12
  %v1962 = vadd.f32 %v1960, 1e-12
  %v1963 = vrsqrt.pop %v1961
  %v1964 = vrsqrt.pop %v1962
  %v1965 = vmul.f32 %v1949, %v1963
  %v1966 = vmul.f32 %v1950, %v1964
  %v1967 = vlaneseq
  %v1968 = vshrl.u32 %v1967, 7
  %v1969 = vsub.s32 6, %v1968
  %v1970 = vrot.slane %v38, %v1969
  %v1971 = vmul.f32 %v1965, %v1970
  %v1972 = vmul.f32 %v1966, %v1970
  %v1973 = vlaneseq
  %v1974 = vshrl.u32 %v1973, 7
  %v1975 = vsub.s32 7, %v1974
  %v1976 = vrot.slane %v38, %v1975
  %v1977 = vadd.f32 %v1971, %v1976
  %v1978 = vadd.f32 %v1972, %v1976
  %v1981 = vrot.slane %v1978, 7
  %vm1982 = vcmask 1041409
  %v1983 = vsel %vm1982, %v1981, %v1977
  %vm1985 = vcmask 1041408
  %v1986 = vsel %vm1985, %v1983, 0.0
  %v1987 = vld [vmem:[%s8] sm:$0xff]
  %v1988 = vld [vmem:[%s8 + $0x8] sm:$0xff]
  %v1989 = vld [vmem:[%s8 + $0x10] sm:$0xff]
  %v1990 = vld [vmem:[%s8 + $0x18] sm:$0xff]
  %v1991 = vpack.c.bf16 %v1986, %v1986
  %v1992 = vlaneseq
  %v1993 = vshrl.u32 %v1992, 7
  %v1994 = vsub.s32 2, %v1993
  %v1995 = vrot.slane %v36, %v1994
  %v2000 = vunpack.c.h.b16 %v1987
  %v2001 = vunpack.c.h.b16 %v1988
  %v2002 = vunpack.c.h.b16 %v1989
  %v2003 = vunpack.c.h.b16 %v1990
  %v2004 = vpack.c.b16 %v2001, %v2000
  %v2005 = vpack.c.b16 %v2003, %v2002
  %v2009 = vsel %vm203, %v1991, 0
  %2011 = vmatprep.subr.bf16.mxu0 0
  %2012 = vmatpush1.bf16.msra.mxu0 %v2004
  %2013 = vmatprep.subr.bf16.mxu0 0
  %2014 = vmatpush1.bf16.msra.mxu0 %v2005
  %2015 = vmatprep.subr.bf16.mxu0 0
  %2016 = vmatpush1.bf16.msra.mxu0 0
  %2017 = vmatprep.subr.bf16.mxu0 0
  %2018 = vmatpush1.bf16.msra.mxu0 0
  %2019 = vmatprep.subr.bf16.mxu0 0
  %2020 = vmatpush1.bf16.msra.mxu0 0
  %2021 = vmatprep.subr.bf16.mxu0 0
  %2022 = vmatpush1.bf16.msra.mxu0 0
  %2023 = vmatprep.subr.bf16.mxu0 0
  %2024 = vmatpush1.bf16.msra.mxu0 0
  %2025 = vmatprep.subr.bf16.mxu0 0
  %2026 = vmatpush1.bf16.msra.mxu0 0
  %2027 = vmatprep.subr.bf16.mxu0 0
  %2028 = vmatpush1.bf16.msra.mxu0 0
  %2029 = vmatprep.subr.bf16.mxu0 0
  %2030 = vmatpush1.bf16.msra.mxu0 0
  %2031 = vmatprep.subr.bf16.mxu0 0
  %2032 = vmatpush1.bf16.msra.mxu0 0
  %2033 = vmatprep.subr.bf16.mxu0 0
  %2034 = vmatpush1.bf16.msra.mxu0 0
  %2035 = vmatprep.subr.bf16.mxu0 0
  %2036 = vmatpush1.bf16.msra.mxu0 0
  %2037 = vmatprep.subr.bf16.mxu0 0
  %2038 = vmatpush1.bf16.msra.mxu0 0
  %2039 = vmatprep.subr.bf16.mxu0 0
  %2040 = vmatpush1.bf16.msra.mxu0 0
  %2041 = vmatprep.subr.bf16.mxu0 0
  %2042 = vmatpush1.bf16.msra.mxu0 0
  %2043 = vmatprep.mubr.bf16.mxu0 0
  %2044 = vmatmul.mubr.bf16.gmra.mrb[0].mxu0 %v2009
  %v2045 = vpop.f32.mrb[0].mxu0
  %v2046 = vadd.f32 %v1995, %v2045
  %v2047 = vpop.f32.mrb[0].mxu0
  %v2048 = vpop.f32.mrb[0].mxu0
  %v2049 = vpop.f32.mrb[0].mxu0
  %2050 = vdwg.mxu0
  %v2051 = vtanh.pop %v2046
  %v2052 = vpack.c.bf16 %v2051, %v2051
  %v2053 = vlaneseq
  %v2054 = vshrl.u32 %v2053, 7
  %v2055 = vsub.s32 3, %v2054
  %v2056 = vrot.slane %v36, %v2055
  %v2057 = vunpack.c.l.b16 %v1987
  %v2058 = vunpack.c.l.b16 %v1988
  %v2059 = vunpack.c.l.b16 %v1989
  %v2060 = vunpack.c.l.b16 %v1990
  %v2061 = vpack.c.b16 %v2058, %v2057
  %v2062 = vpack.c.b16 %v2060, %v2059
  %v2066 = vsel %vm203, %v2052, 0
  %2068 = vmatprep.subr.bf16.mxu0 0
  %2069 = vmatpush1.bf16.msra.mxu0 %v2061
  %2070 = vmatprep.subr.bf16.mxu0 0
  %2071 = vmatpush1.bf16.msra.mxu0 %v2062
  %2072 = vmatprep.subr.bf16.mxu0 0
  %2073 = vmatpush1.bf16.msra.mxu0 0
  %2074 = vmatprep.subr.bf16.mxu0 0
  %2075 = vmatpush1.bf16.msra.mxu0 0
  %2076 = vmatprep.subr.bf16.mxu0 0
  %2077 = vmatpush1.bf16.msra.mxu0 0
  %2078 = vmatprep.subr.bf16.mxu0 0
  %2079 = vmatpush1.bf16.msra.mxu0 0
  %2080 = vmatprep.subr.bf16.mxu0 0
  %2081 = vmatpush1.bf16.msra.mxu0 0
  %2082 = vmatprep.subr.bf16.mxu0 0
  %2083 = vmatpush1.bf16.msra.mxu0 0
  %2084 = vmatprep.subr.bf16.mxu0 0
  %2085 = vmatpush1.bf16.msra.mxu0 0
  %2086 = vmatprep.subr.bf16.mxu0 0
  %2087 = vmatpush1.bf16.msra.mxu0 0
  %2088 = vmatprep.subr.bf16.mxu0 0
  %2089 = vmatpush1.bf16.msra.mxu0 0
  %2090 = vmatprep.subr.bf16.mxu0 0
  %2091 = vmatpush1.bf16.msra.mxu0 0
  %2092 = vmatprep.subr.bf16.mxu0 0
  %2093 = vmatpush1.bf16.msra.mxu0 0
  %2094 = vmatprep.subr.bf16.mxu0 0
  %2095 = vmatpush1.bf16.msra.mxu0 0
  %2096 = vmatprep.subr.bf16.mxu0 0
  %2097 = vmatpush1.bf16.msra.mxu0 0
  %2098 = vmatprep.subr.bf16.mxu0 0
  %2099 = vmatpush1.bf16.msra.mxu0 0
  %2100 = vmatprep.mubr.bf16.mxu0 0
  %2101 = vmatmul.mubr.bf16.gmra.mrb[0].mxu0 %v2066
  %v2102 = vpop.f32.mrb[0].mxu0
  %v2103 = vadd.f32 %v2056, %v2102
  %v2104 = vpop.f32.mrb[0].mxu0
  %v2105 = vpop.f32.mrb[0].mxu0
  %v2106 = vpop.f32.mrb[0].mxu0
  %2107 = vdwg.mxu0
  %2108 = vst [vmem:[%s10] sm:$0xff] %v2103
  // Predicated region
  $region42: #{bert_movie_plot_classifier.1} parent=0 // pred_check
    _
  $region43: #{bert_movie_plot_classifier.1} parent=0 // pred_check_branch
    %2110 = sbr.rel (0) target = $region45
  $region44: #{bert_movie_plot_classifier.1} parent=0 // pred_region
    _
  $region45: #{bert_movie_plot_classifier.1} parent=0 // pred_fallthru
    _
  // Predicated region
  $region46: #{bert_movie_plot_classifier.1} parent=0 // pred_check
    _
  $region47: #{bert_movie_plot_classifier.1} parent=0 // pred_check_branch
    %2112 = sbr.rel (0) target = $region49
  $region48: #{bert_movie_plot_classifier.1} parent=0 // pred_region
    _
  $region49: #{bert_movie_plot_classifier.1} parent=0 // pred_fallthru
    _

</llo_original>
